<compile_context>
chip_gen: v7x
topology: tpu7x:2x2x1
jax: 0.10.0
libtpu: 0.0.40
codegen_flags: <defaults>
</compile_context>

<pallas_src>
import jax
import jax.numpy as jnp
from jax import lax
from jax.experimental import pallas as pl

# ---------------- configuration (small, consistent with the module) ----------
B = 2            # batch
T = 2            # num_timesteps
N = 8            # num nodes
D = 64           # lifting_dim
H = 4            # num_heads
DH = D // H      # d_head (must be even)
S = T * N        # sequence length
ROPE_BASE = 1000.0
assert DH % 2 == 0


# ---------------- Pallas kernel ----------------------------------------------
def qsa_kernel(x_ref, w_all_ref, b_all_ref, wo_ref, bo_ref, cos_ref, sin_ref, o_ref):
    """Whole problem in one invocation (no grid).

    x_ref     : [B*S, D]   flattened input (batch-major rows)
    w_all_ref : [D, 5*D]   fused [Wq_s | Wq_s@swap | Wk | Wk@swap | Wv]
    b_all_ref : [1, 5*D]   fused biases (same column layout)
    wo_ref    : [D, D]     output projection
    bo_ref    : [1, D]
    cos_ref   : [B*S, D]   interleaved RoPE cos, tiled over batch & heads
    sin_ref   : [B*S, D]   interleaved RoPE sin with the +/- sign folded in
    o_ref     : [S, B*D]   lane-dense output slab (batch along lanes)
    """
    x = x_ref[...]                                                    # [B*S, D]

    # One fused projection: q, q_pair_swapped, k, k_pair_swapped, v.
    proj = jnp.dot(x, w_all_ref[...], preferred_element_type=jnp.float32) + b_all_ref[...]

    cos = cos_ref[...]
    sin = sin_ref[...]                                                # sign folded in

    # Full-width interleaved RoPE, purely elementwise:
    #   out[:, j] = t[:, j] * cos[:, j] + t[:, j^1] * sin_signed[:, j]
    q = proj[:, 0 * D:1 * D] * cos + proj[:, 1 * D:2 * D] * sin       # [B*S, D]
    k = proj[:, 2 * D:3 * D] * cos + proj[:, 3 * D:4 * D] * sin       # [B*S, D]
    v = proj[:, 4 * D:5 * D]                                          # [B*S, D]

    # Per (batch, head) attention on tiny [S, DH] tiles; contexts are collected
    # so the output projection is a single K=64 matmul.
    ctx_rows = []
    for b in range(B):                                                # static loops
        r0 = b * S
        head_ctx = []
        for h in range(H):
            c0 = h * DH
            q_bh = q[r0:r0 + S, c0:c0 + DH]
            k_bh = k[r0:r0 + S, c0:c0 + DH]
            v_bh = v[r0:r0 + S, c0:c0 + DH]

            # q already carries the per-head 1/attention_denom scale (folded into Wq).
            scores = lax.dot_general(q_bh, k_bh, (((1,), (1,)), ((), ())),
                                     preferred_element_type=jnp.float32)      # [S, S]
            # numerically-stable softmax over keys (exact normalization)
            scores = scores - jnp.max(scores, axis=-1, keepdims=True)
            p = jnp.exp(scores)
            p = p / jnp.sum(p, axis=-1, keepdims=True)
            # (attention dropout = identity in eval mode)

            head_ctx.append(jnp.dot(p, v_bh, preferred_element_type=jnp.float32))  # [S, DH]
        ctx_rows.append(jnp.concatenate(head_ctx, axis=-1))           # [S, D]

    ctx = jnp.concatenate(ctx_rows, axis=0)                           # [B*S, D]

    # Single full-width output projection.
    out = jnp.dot(ctx, wo_ref[...], preferred_element_type=jnp.float32) + bo_ref[...]

    # Lane-dense [S, B*D] = [16, 128] store (full 128-lane writes).
    o_ref[...] = jnp.concatenate([out[b * S:(b + 1) * S, :] for b in range(B)],
                                 axis=-1).astype(o_ref.dtype)


# ---------------- wrapper -----------------------------------------------------
@jax.jit
def quadratic_self_attention(x, params):
    """x: [B, T, N, D] -> [B, T, N, D]."""
    b, t, n, d = x.shape
    s = t * n
    x_bs = x.reshape(b * s, d)                        # batch-major rows

    (w_all, b_all, wo, bo, cos_bs, sin_bs) = params

    # Single invocation, no grid: every operand is a full-array VMEM block.
    out_lane = pl.pallas_call(
        qsa_kernel,
        out_shape=jax.ShapeDtypeStruct((s, b * d), jnp.float32),
    )(x_bs, w_all, b_all, wo, bo, cos_bs, sin_bs)

    # undo the lane-dense layout: [S, B*D] -> [B, S, D] -> [B, T, N, D]
    return out_lane.reshape(s, b, d).transpose(1, 0, 2).reshape(b, t, n, d)


# ---------------- parameter / RoPE-table construction -------------------------
def build_params(key):
    ks = jax.random.split(key, 6)
    scale = 0.05
    # Linear layers stored as [in, out] (y = x @ W + b). kv_projs split into K/V halves.
    wq = scale * jax.random.normal(ks[0], (D, D), jnp.float32)
    bq = scale * jax.random.normal(ks[1], (1, D), jnp.float32)
    wkv = scale * jax.random.normal(ks[2], (D, 2 * D), jnp.float32)
    bkv = scale * jax.random.normal(ks[3], (1, 2 * D), jnp.float32)
    wk, wv = wkv[:, :D], wkv[:, D:]
    bk, bv = bkv[:, :D], bkv[:, D:]
    wo = scale * jax.random.normal(ks[4], (D, D), jnp.float32)
    bo = scale * jax.random.normal(ks[5], (1, D), jnp.float32)
    denom = jnp.full((H,), float(DH), jnp.float32)            # attention_denom (buffer)

    raw = (wq, bq, wk, bk, wv, bv, wo, bo, denom)

    # ---- derived kernel operands ----
    # Fold per-head 1/denom into the query projection (exact; the scale is
    # constant within each head so it commutes with the per-head RoPE rotation).
    inv_denom_cols = jnp.repeat(1.0 / denom, DH)                              # [D]
    wq_s = wq * inv_denom_cols[None, :]
    bq_s = bq * inv_denom_cols[None, :]

    idx = jnp.arange(D)
    swap = jax.nn.one_hot(idx ^ 1, D, dtype=jnp.float32)                      # column j <-> j^1

    # Fused projection: [Wq_s | Wq_s@swap | Wk | Wk@swap | Wv]  ([D, 5D])
    w_all = jnp.concatenate([wq_s, wq_s @ swap, wk, wk @ swap, wv], axis=1)
    b_all = jnp.concatenate([bq_s, bq_s @ swap, bk, bk @ swap, bv], axis=1)   # [1, 5D]

    # Full-width interleaved RoPE tables (TemporalRoPEWithOffset, offsets = 0).
    half = DH // 2
    positions = jnp.repeat(jnp.arange(T, dtype=jnp.float32), N)               # [S]
    freqs = 1.0 / (ROPE_BASE ** (2.0 * jnp.arange(half, dtype=jnp.float32) / DH))
    angle = positions[:, None] * freqs[None, :]                               # [S, half]
    cos_head = jnp.repeat(jnp.cos(angle), 2, axis=-1)                         # [S, DH] interleaved
    sin_head = jnp.repeat(jnp.sin(angle), 2, axis=-1)
    cos_full = jnp.tile(cos_head, (1, H))                                     # [S, D]
    sin_full = jnp.tile(sin_head, (1, H))

    sign = jnp.where(idx % 2 == 0, -1.0, 1.0).astype(jnp.float32)             # -1 even, +1 odd
    sin_signed = sin_full * sign[None, :]                                     # sign folded in

    # Tile over batch so the tables match the [B*S, D] row layout.
    cos_bs = jnp.tile(cos_full, (B, 1))                                       # [B*S, D]
    sin_bs = jnp.tile(sin_signed, (B, 1))                                     # [B*S, D]

    kparams = (w_all, b_all, wo, bo, cos_bs, sin_bs)
    return kparams, raw


# ---------------- pure-JAX reference (mirrors the PyTorch forward) ------------
def reference(x, raw):
    (wq, bq, wk, bk, wv, bv, wo, bo, denom) = raw
    b, t, n, d = x.shape
    s = t * n
    xf = x.reshape(b, s, d)
    q = (xf @ wq + bq).reshape(b, s, H, DH).transpose(0, 2, 1, 3)
    k = (xf @ wk + bk).reshape(b, s, H, DH).transpose(0, 2, 1, 3)
    v = (xf @ wv + bv).reshape(b, s, H, DH).transpose(0, 2, 1, 3)

    half = DH // 2
    positions = jnp.repeat(jnp.arange(t, dtype=jnp.float32), n)               # [s]
    freqs = 1.0 / (ROPE_BASE ** (2.0 * jnp.arange(half, dtype=jnp.float32) / DH))
    angle = positions[:, None] * freqs[None, :]                               # [s, half]
    cos = jnp.cos(angle)[None, None]                                          # [1,1,s,half]
    sin = jnp.sin(angle)[None, None]

    def rope(tsr):
        t1 = tsr[..., 0::2]
        t2 = tsr[..., 1::2]
        r0 = t1 * cos - t2 * sin
        r1 = t1 * sin + t2 * cos
        return jnp.stack([r0, r1], axis=-1).reshape(tsr.shape)

    q = rope(q)
    k = rope(k)
    scores = jnp.einsum("bhsd,bhkd->bhsk", q, k) / denom[None, :, None, None]
    w = jax.nn.softmax(scores, axis=-1)
    out = jnp.einsum("bhsk,bhkd->bhsd", w, v)
    out = out.transpose(0, 2, 1, 3).reshape(b, s, d)
    out = out @ wo + bo
    return out.reshape(b, t, n, d)


# ---------------- main --------------------------------------------------------
if __name__ == "__main__":
    key = jax.random.PRNGKey(0)
    k_x, k_p = jax.random.split(key)
    x = jax.random.normal(k_x, (B, T, N, D), jnp.float32)
    kparams, raw = build_params(k_p)

    out = quadratic_self_attention(x, kparams)
    out = jax.block_until_ready(out)

    ref = reference(x, raw)
    assert out.shape == (B, T, N, D), out.shape
    max_err = float(jnp.max(jnp.abs(out - ref)))
    assert jnp.allclose(out, ref, rtol=1e-3, atol=1e-3), max_err

    print("KERNEL_OK")
</pallas_src>

<mosaic_0001>
module attributes {stable_mosaic.version = 11 : i64} {
  func.func @qsa_kernel(%arg0: memref<32x64xf32, #tpu.memory_space<vmem>>, %arg1: memref<64x320xf32, #tpu.memory_space<vmem>>, %arg2: memref<1x320xf32, #tpu.memory_space<vmem>>, %arg3: memref<64x64xf32, #tpu.memory_space<vmem>>, %arg4: memref<1x64xf32, #tpu.memory_space<vmem>>, %arg5: memref<32x64xf32, #tpu.memory_space<vmem>>, %arg6: memref<32x64xf32, #tpu.memory_space<vmem>>, %arg7: memref<16x128xf32, #tpu.memory_space<vmem>>) attributes {dimension_semantics = [], scalar_prefetch = 0 : i64, scratch_operands = 0 : i64, tpu.core_type = #tpu.core_type<tc>} {
    %c0 = arith.constant 0 : index
    %c0_0 = arith.constant 0 : index
    %0 = vector.load %arg0[%c0, %c0_0] : memref<32x64xf32, #tpu.memory_space<vmem>>, vector<32x64xf32>
    %c0_1 = arith.constant 0 : index
    %c0_2 = arith.constant 0 : index
    %1 = vector.load %arg1[%c0_1, %c0_2] : memref<64x320xf32, #tpu.memory_space<vmem>>, vector<64x320xf32>
    %cst = arith.constant dense<0.000000e+00> : vector<32x320xf32>
    %2 = tpu.matmul %0, %1, %cst {dimension_numbers = #tpu.dot_dimension_numbers<[1], [0], [0], [1], [0, 0, 1, 1], [], []>} : vector<32x64xf32>, vector<64x320xf32>, vector<32x320xf32> -> vector<32x320xf32>
    %c0_3 = arith.constant 0 : index
    %c0_4 = arith.constant 0 : index
    %3 = vector.load %arg2[%c0_3, %c0_4] : memref<1x320xf32, #tpu.memory_space<vmem>>, vector<1x320xf32>
    %4 = vector.broadcast %3 : vector<1x320xf32> to vector<32x320xf32>
    %5 = arith.addf %2, %4 : vector<32x320xf32>
    %c0_5 = arith.constant 0 : index
    %c0_6 = arith.constant 0 : index
    %6 = vector.load %arg5[%c0_5, %c0_6] : memref<32x64xf32, #tpu.memory_space<vmem>>, vector<32x64xf32>
    %c0_7 = arith.constant 0 : index
    %c0_8 = arith.constant 0 : index
    %7 = vector.load %arg6[%c0_7, %c0_8] : memref<32x64xf32, #tpu.memory_space<vmem>>, vector<32x64xf32>
    %8 = vector.extract_strided_slice %5 {offsets = [0, 0], sizes = [32, 64], strides = [1, 1]} : vector<32x320xf32> to vector<32x64xf32>
    %9 = arith.mulf %8, %6 : vector<32x64xf32>
    %10 = vector.extract_strided_slice %5 {offsets = [0, 64], sizes = [32, 64], strides = [1, 1]} : vector<32x320xf32> to vector<32x64xf32>
    %11 = arith.mulf %10, %7 : vector<32x64xf32>
    %12 = arith.addf %9, %11 : vector<32x64xf32>
    %13 = vector.extract_strided_slice %5 {offsets = [0, 128], sizes = [32, 64], strides = [1, 1]} : vector<32x320xf32> to vector<32x64xf32>
    %14 = arith.mulf %13, %6 : vector<32x64xf32>
    %15 = vector.extract_strided_slice %5 {offsets = [0, 192], sizes = [32, 64], strides = [1, 1]} : vector<32x320xf32> to vector<32x64xf32>
    %16 = arith.mulf %15, %7 : vector<32x64xf32>
    %17 = arith.addf %14, %16 : vector<32x64xf32>
    %18 = vector.extract_strided_slice %5 {offsets = [0, 256], sizes = [32, 64], strides = [1, 1]} : vector<32x320xf32> to vector<32x64xf32>
    %19 = vector.extract_strided_slice %12 {offsets = [0, 0], sizes = [16, 16], strides = [1, 1]} : vector<32x64xf32> to vector<16x16xf32>
    %20 = vector.extract_strided_slice %17 {offsets = [0, 0], sizes = [16, 16], strides = [1, 1]} : vector<32x64xf32> to vector<16x16xf32>
    %21 = vector.extract_strided_slice %18 {offsets = [0, 0], sizes = [16, 16], strides = [1, 1]} : vector<32x64xf32> to vector<16x16xf32>
    %cst_9 = arith.constant dense<0.000000e+00> : vector<16x16xf32>
    %22 = tpu.matmul %19, %20, %cst_9 {dimension_numbers = #tpu.dot_dimension_numbers<[1], [1], [0], [0], [0, 0, 1, 0], [], []>} : vector<16x16xf32>, vector<16x16xf32>, vector<16x16xf32> -> vector<16x16xf32>
    %cst_10 = arith.constant dense<0xFF800000> : vector<16xf32>
    %23 = vector.multi_reduction <maximumf>, %22, %cst_10 [1] : vector<16x16xf32> to vector<16xf32>
    %24 = vector.shape_cast %23 : vector<16xf32> to vector<16x1xf32>
    %25 = vector.broadcast %24 : vector<16x1xf32> to vector<16x16xf32>
    %26 = arith.subf %22, %25 : vector<16x16xf32>
    %27 = math.exp %26 : vector<16x16xf32>
    %cst_11 = arith.constant dense<0.000000e+00> : vector<16xf32>
    %28 = vector.multi_reduction <add>, %27, %cst_11 [1] : vector<16x16xf32> to vector<16xf32>
    %29 = vector.shape_cast %28 : vector<16xf32> to vector<16x1xf32>
    %30 = vector.broadcast %29 : vector<16x1xf32> to vector<16x16xf32>
    %31 = arith.divf %27, %30 : vector<16x16xf32>
    %cst_12 = arith.constant dense<0.000000e+00> : vector<16x16xf32>
    %32 = tpu.matmul %31, %21, %cst_12 {dimension_numbers = #tpu.dot_dimension_numbers<[1], [0], [0], [1], [0, 0, 1, 1], [], []>} : vector<16x16xf32>, vector<16x16xf32>, vector<16x16xf32> -> vector<16x16xf32>
    %33 = vector.extract_strided_slice %12 {offsets = [0, 16], sizes = [16, 16], strides = [1, 1]} : vector<32x64xf32> to vector<16x16xf32>
    %34 = vector.extract_strided_slice %17 {offsets = [0, 16], sizes = [16, 16], strides = [1, 1]} : vector<32x64xf32> to vector<16x16xf32>
    %35 = vector.extract_strided_slice %18 {offsets = [0, 16], sizes = [16, 16], strides = [1, 1]} : vector<32x64xf32> to vector<16x16xf32>
    %cst_13 = arith.constant dense<0.000000e+00> : vector<16x16xf32>
    %36 = tpu.matmul %33, %34, %cst_13 {dimension_numbers = #tpu.dot_dimension_numbers<[1], [1], [0], [0], [0, 0, 1, 0], [], []>} : vector<16x16xf32>, vector<16x16xf32>, vector<16x16xf32> -> vector<16x16xf32>
    %cst_14 = arith.constant dense<0xFF800000> : vector<16xf32>
    %37 = vector.multi_reduction <maximumf>, %36, %cst_14 [1] : vector<16x16xf32> to vector<16xf32>
    %38 = vector.shape_cast %37 : vector<16xf32> to vector<16x1xf32>
    %39 = vector.broadcast %38 : vector<16x1xf32> to vector<16x16xf32>
    %40 = arith.subf %36, %39 : vector<16x16xf32>
    %41 = math.exp %40 : vector<16x16xf32>
    %cst_15 = arith.constant dense<0.000000e+00> : vector<16xf32>
    %42 = vector.multi_reduction <add>, %41, %cst_15 [1] : vector<16x16xf32> to vector<16xf32>
    %43 = vector.shape_cast %42 : vector<16xf32> to vector<16x1xf32>
    %44 = vector.broadcast %43 : vector<16x1xf32> to vector<16x16xf32>
    %45 = arith.divf %41, %44 : vector<16x16xf32>
    %cst_16 = arith.constant dense<0.000000e+00> : vector<16x16xf32>
    %46 = tpu.matmul %45, %35, %cst_16 {dimension_numbers = #tpu.dot_dimension_numbers<[1], [0], [0], [1], [0, 0, 1, 1], [], []>} : vector<16x16xf32>, vector<16x16xf32>, vector<16x16xf32> -> vector<16x16xf32>
    %47 = vector.extract_strided_slice %12 {offsets = [0, 32], sizes = [16, 16], strides = [1, 1]} : vector<32x64xf32> to vector<16x16xf32>
    %48 = vector.extract_strided_slice %17 {offsets = [0, 32], sizes = [16, 16], strides = [1, 1]} : vector<32x64xf32> to vector<16x16xf32>
    %49 = vector.extract_strided_slice %18 {offsets = [0, 32], sizes = [16, 16], strides = [1, 1]} : vector<32x64xf32> to vector<16x16xf32>
    %cst_17 = arith.constant dense<0.000000e+00> : vector<16x16xf32>
    %50 = tpu.matmul %47, %48, %cst_17 {dimension_numbers = #tpu.dot_dimension_numbers<[1], [1], [0], [0], [0, 0, 1, 0], [], []>} : vector<16x16xf32>, vector<16x16xf32>, vector<16x16xf32> -> vector<16x16xf32>
    %cst_18 = arith.constant dense<0xFF800000> : vector<16xf32>
    %51 = vector.multi_reduction <maximumf>, %50, %cst_18 [1] : vector<16x16xf32> to vector<16xf32>
    %52 = vector.shape_cast %51 : vector<16xf32> to vector<16x1xf32>
    %53 = vector.broadcast %52 : vector<16x1xf32> to vector<16x16xf32>
    %54 = arith.subf %50, %53 : vector<16x16xf32>
    %55 = math.exp %54 : vector<16x16xf32>
    %cst_19 = arith.constant dense<0.000000e+00> : vector<16xf32>
    %56 = vector.multi_reduction <add>, %55, %cst_19 [1] : vector<16x16xf32> to vector<16xf32>
    %57 = vector.shape_cast %56 : vector<16xf32> to vector<16x1xf32>
    %58 = vector.broadcast %57 : vector<16x1xf32> to vector<16x16xf32>
    %59 = arith.divf %55, %58 : vector<16x16xf32>
    %cst_20 = arith.constant dense<0.000000e+00> : vector<16x16xf32>
    %60 = tpu.matmul %59, %49, %cst_20 {dimension_numbers = #tpu.dot_dimension_numbers<[1], [0], [0], [1], [0, 0, 1, 1], [], []>} : vector<16x16xf32>, vector<16x16xf32>, vector<16x16xf32> -> vector<16x16xf32>
    %61 = vector.extract_strided_slice %12 {offsets = [0, 48], sizes = [16, 16], strides = [1, 1]} : vector<32x64xf32> to vector<16x16xf32>
    %62 = vector.extract_strided_slice %17 {offsets = [0, 48], sizes = [16, 16], strides = [1, 1]} : vector<32x64xf32> to vector<16x16xf32>
    %63 = vector.extract_strided_slice %18 {offsets = [0, 48], sizes = [16, 16], strides = [1, 1]} : vector<32x64xf32> to vector<16x16xf32>
    %cst_21 = arith.constant dense<0.000000e+00> : vector<16x16xf32>
    %64 = tpu.matmul %61, %62, %cst_21 {dimension_numbers = #tpu.dot_dimension_numbers<[1], [1], [0], [0], [0, 0, 1, 0], [], []>} : vector<16x16xf32>, vector<16x16xf32>, vector<16x16xf32> -> vector<16x16xf32>
    %cst_22 = arith.constant dense<0xFF800000> : vector<16xf32>
    %65 = vector.multi_reduction <maximumf>, %64, %cst_22 [1] : vector<16x16xf32> to vector<16xf32>
    %66 = vector.shape_cast %65 : vector<16xf32> to vector<16x1xf32>
    %67 = vector.broadcast %66 : vector<16x1xf32> to vector<16x16xf32>
    %68 = arith.subf %64, %67 : vector<16x16xf32>
    %69 = math.exp %68 : vector<16x16xf32>
    %cst_23 = arith.constant dense<0.000000e+00> : vector<16xf32>
    %70 = vector.multi_reduction <add>, %69, %cst_23 [1] : vector<16x16xf32> to vector<16xf32>
    %71 = vector.shape_cast %70 : vector<16xf32> to vector<16x1xf32>
    %72 = vector.broadcast %71 : vector<16x1xf32> to vector<16x16xf32>
    %73 = arith.divf %69, %72 : vector<16x16xf32>
    %cst_24 = arith.constant dense<0.000000e+00> : vector<16x16xf32>
    %74 = tpu.matmul %73, %63, %cst_24 {dimension_numbers = #tpu.dot_dimension_numbers<[1], [0], [0], [1], [0, 0, 1, 1], [], []>} : vector<16x16xf32>, vector<16x16xf32>, vector<16x16xf32> -> vector<16x16xf32>
    %75 = tpu.concatenate %32, %46, %60, %74 in 1 : vector<16x16xf32>, vector<16x16xf32>, vector<16x16xf32>, vector<16x16xf32> -> vector<16x64xf32>
    %76 = vector.extract_strided_slice %12 {offsets = [16, 0], sizes = [16, 16], strides = [1, 1]} : vector<32x64xf32> to vector<16x16xf32>
    %77 = vector.extract_strided_slice %17 {offsets = [16, 0], sizes = [16, 16], strides = [1, 1]} : vector<32x64xf32> to vector<16x16xf32>
    %78 = vector.extract_strided_slice %18 {offsets = [16, 0], sizes = [16, 16], strides = [1, 1]} : vector<32x64xf32> to vector<16x16xf32>
    %cst_25 = arith.constant dense<0.000000e+00> : vector<16x16xf32>
    %79 = tpu.matmul %76, %77, %cst_25 {dimension_numbers = #tpu.dot_dimension_numbers<[1], [1], [0], [0], [0, 0, 1, 0], [], []>} : vector<16x16xf32>, vector<16x16xf32>, vector<16x16xf32> -> vector<16x16xf32>
    %cst_26 = arith.constant dense<0xFF800000> : vector<16xf32>
    %80 = vector.multi_reduction <maximumf>, %79, %cst_26 [1] : vector<16x16xf32> to vector<16xf32>
    %81 = vector.shape_cast %80 : vector<16xf32> to vector<16x1xf32>
    %82 = vector.broadcast %81 : vector<16x1xf32> to vector<16x16xf32>
    %83 = arith.subf %79, %82 : vector<16x16xf32>
    %84 = math.exp %83 : vector<16x16xf32>
    %cst_27 = arith.constant dense<0.000000e+00> : vector<16xf32>
    %85 = vector.multi_reduction <add>, %84, %cst_27 [1] : vector<16x16xf32> to vector<16xf32>
    %86 = vector.shape_cast %85 : vector<16xf32> to vector<16x1xf32>
    %87 = vector.broadcast %86 : vector<16x1xf32> to vector<16x16xf32>
    %88 = arith.divf %84, %87 : vector<16x16xf32>
    %cst_28 = arith.constant dense<0.000000e+00> : vector<16x16xf32>
    %89 = tpu.matmul %88, %78, %cst_28 {dimension_numbers = #tpu.dot_dimension_numbers<[1], [0], [0], [1], [0, 0, 1, 1], [], []>} : vector<16x16xf32>, vector<16x16xf32>, vector<16x16xf32> -> vector<16x16xf32>
    %90 = vector.extract_strided_slice %12 {offsets = [16, 16], sizes = [16, 16], strides = [1, 1]} : vector<32x64xf32> to vector<16x16xf32>
    %91 = vector.extract_strided_slice %17 {offsets = [16, 16], sizes = [16, 16], strides = [1, 1]} : vector<32x64xf32> to vector<16x16xf32>
    %92 = vector.extract_strided_slice %18 {offsets = [16, 16], sizes = [16, 16], strides = [1, 1]} : vector<32x64xf32> to vector<16x16xf32>
    %cst_29 = arith.constant dense<0.000000e+00> : vector<16x16xf32>
    %93 = tpu.matmul %90, %91, %cst_29 {dimension_numbers = #tpu.dot_dimension_numbers<[1], [1], [0], [0], [0, 0, 1, 0], [], []>} : vector<16x16xf32>, vector<16x16xf32>, vector<16x16xf32> -> vector<16x16xf32>
    %cst_30 = arith.constant dense<0xFF800000> : vector<16xf32>
    %94 = vector.multi_reduction <maximumf>, %93, %cst_30 [1] : vector<16x16xf32> to vector<16xf32>
    %95 = vector.shape_cast %94 : vector<16xf32> to vector<16x1xf32>
    %96 = vector.broadcast %95 : vector<16x1xf32> to vector<16x16xf32>
    %97 = arith.subf %93, %96 : vector<16x16xf32>
    %98 = math.exp %97 : vector<16x16xf32>
    %cst_31 = arith.constant dense<0.000000e+00> : vector<16xf32>
    %99 = vector.multi_reduction <add>, %98, %cst_31 [1] : vector<16x16xf32> to vector<16xf32>
    %100 = vector.shape_cast %99 : vector<16xf32> to vector<16x1xf32>
    %101 = vector.broadcast %100 : vector<16x1xf32> to vector<16x16xf32>
    %102 = arith.divf %98, %101 : vector<16x16xf32>
    %cst_32 = arith.constant dense<0.000000e+00> : vector<16x16xf32>
    %103 = tpu.matmul %102, %92, %cst_32 {dimension_numbers = #tpu.dot_dimension_numbers<[1], [0], [0], [1], [0, 0, 1, 1], [], []>} : vector<16x16xf32>, vector<16x16xf32>, vector<16x16xf32> -> vector<16x16xf32>
    %104 = vector.extract_strided_slice %12 {offsets = [16, 32], sizes = [16, 16], strides = [1, 1]} : vector<32x64xf32> to vector<16x16xf32>
    %105 = vector.extract_strided_slice %17 {offsets = [16, 32], sizes = [16, 16], strides = [1, 1]} : vector<32x64xf32> to vector<16x16xf32>
    %106 = vector.extract_strided_slice %18 {offsets = [16, 32], sizes = [16, 16], strides = [1, 1]} : vector<32x64xf32> to vector<16x16xf32>
    %cst_33 = arith.constant dense<0.000000e+00> : vector<16x16xf32>
    %107 = tpu.matmul %104, %105, %cst_33 {dimension_numbers = #tpu.dot_dimension_numbers<[1], [1], [0], [0], [0, 0, 1, 0], [], []>} : vector<16x16xf32>, vector<16x16xf32>, vector<16x16xf32> -> vector<16x16xf32>
    %cst_34 = arith.constant dense<0xFF800000> : vector<16xf32>
    %108 = vector.multi_reduction <maximumf>, %107, %cst_34 [1] : vector<16x16xf32> to vector<16xf32>
    %109 = vector.shape_cast %108 : vector<16xf32> to vector<16x1xf32>
    %110 = vector.broadcast %109 : vector<16x1xf32> to vector<16x16xf32>
    %111 = arith.subf %107, %110 : vector<16x16xf32>
    %112 = math.exp %111 : vector<16x16xf32>
    %cst_35 = arith.constant dense<0.000000e+00> : vector<16xf32>
    %113 = vector.multi_reduction <add>, %112, %cst_35 [1] : vector<16x16xf32> to vector<16xf32>
    %114 = vector.shape_cast %113 : vector<16xf32> to vector<16x1xf32>
    %115 = vector.broadcast %114 : vector<16x1xf32> to vector<16x16xf32>
    %116 = arith.divf %112, %115 : vector<16x16xf32>
    %cst_36 = arith.constant dense<0.000000e+00> : vector<16x16xf32>
    %117 = tpu.matmul %116, %106, %cst_36 {dimension_numbers = #tpu.dot_dimension_numbers<[1], [0], [0], [1], [0, 0, 1, 1], [], []>} : vector<16x16xf32>, vector<16x16xf32>, vector<16x16xf32> -> vector<16x16xf32>
    %118 = vector.extract_strided_slice %12 {offsets = [16, 48], sizes = [16, 16], strides = [1, 1]} : vector<32x64xf32> to vector<16x16xf32>
    %119 = vector.extract_strided_slice %17 {offsets = [16, 48], sizes = [16, 16], strides = [1, 1]} : vector<32x64xf32> to vector<16x16xf32>
    %120 = vector.extract_strided_slice %18 {offsets = [16, 48], sizes = [16, 16], strides = [1, 1]} : vector<32x64xf32> to vector<16x16xf32>
    %cst_37 = arith.constant dense<0.000000e+00> : vector<16x16xf32>
    %121 = tpu.matmul %118, %119, %cst_37 {dimension_numbers = #tpu.dot_dimension_numbers<[1], [1], [0], [0], [0, 0, 1, 0], [], []>} : vector<16x16xf32>, vector<16x16xf32>, vector<16x16xf32> -> vector<16x16xf32>
    %cst_38 = arith.constant dense<0xFF800000> : vector<16xf32>
    %122 = vector.multi_reduction <maximumf>, %121, %cst_38 [1] : vector<16x16xf32> to vector<16xf32>
    %123 = vector.shape_cast %122 : vector<16xf32> to vector<16x1xf32>
    %124 = vector.broadcast %123 : vector<16x1xf32> to vector<16x16xf32>
    %125 = arith.subf %121, %124 : vector<16x16xf32>
    %126 = math.exp %125 : vector<16x16xf32>
    %cst_39 = arith.constant dense<0.000000e+00> : vector<16xf32>
    %127 = vector.multi_reduction <add>, %126, %cst_39 [1] : vector<16x16xf32> to vector<16xf32>
    %128 = vector.shape_cast %127 : vector<16xf32> to vector<16x1xf32>
    %129 = vector.broadcast %128 : vector<16x1xf32> to vector<16x16xf32>
    %130 = arith.divf %126, %129 : vector<16x16xf32>
    %cst_40 = arith.constant dense<0.000000e+00> : vector<16x16xf32>
    %131 = tpu.matmul %130, %120, %cst_40 {dimension_numbers = #tpu.dot_dimension_numbers<[1], [0], [0], [1], [0, 0, 1, 1], [], []>} : vector<16x16xf32>, vector<16x16xf32>, vector<16x16xf32> -> vector<16x16xf32>
    %132 = tpu.concatenate %89, %103, %117, %131 in 1 : vector<16x16xf32>, vector<16x16xf32>, vector<16x16xf32>, vector<16x16xf32> -> vector<16x64xf32>
    %133 = tpu.concatenate %75, %132 in 0 : vector<16x64xf32>, vector<16x64xf32> -> vector<32x64xf32>
    %c0_41 = arith.constant 0 : index
    %c0_42 = arith.constant 0 : index
    %134 = vector.load %arg3[%c0_41, %c0_42] : memref<64x64xf32, #tpu.memory_space<vmem>>, vector<64x64xf32>
    %cst_43 = arith.constant dense<0.000000e+00> : vector<32x64xf32>
    %135 = tpu.matmul %133, %134, %cst_43 {dimension_numbers = #tpu.dot_dimension_numbers<[1], [0], [0], [1], [0, 0, 1, 1], [], []>} : vector<32x64xf32>, vector<64x64xf32>, vector<32x64xf32> -> vector<32x64xf32>
    %c0_44 = arith.constant 0 : index
    %c0_45 = arith.constant 0 : index
    %136 = vector.load %arg4[%c0_44, %c0_45] : memref<1x64xf32, #tpu.memory_space<vmem>>, vector<1x64xf32>
    %137 = vector.broadcast %136 : vector<1x64xf32> to vector<32x64xf32>
    %138 = arith.addf %135, %137 : vector<32x64xf32>
    %139 = vector.extract_strided_slice %138 {offsets = [0, 0], sizes = [16, 64], strides = [1, 1]} : vector<32x64xf32> to vector<16x64xf32>
    %140 = vector.extract_strided_slice %138 {offsets = [16, 0], sizes = [16, 64], strides = [1, 1]} : vector<32x64xf32> to vector<16x64xf32>
    %141 = tpu.concatenate %139, %140 in 1 : vector<16x64xf32>, vector<16x64xf32> -> vector<16x128xf32>
    %c0_46 = arith.constant 0 : index
    %c0_47 = arith.constant 0 : index
    %142 = vector.load %arg7[%c0_46, %c0_47] : memref<16x128xf32, #tpu.memory_space<vmem>>, vector<16x128xf32>
    tpu.vector_store %arg7[%c0_46, %c0_47], %141 {strides = array<i32>} : memref<16x128xf32, #tpu.memory_space<vmem>>, vector<16x128xf32>,
    return
  }
}

</mosaic_0001>

<llo_original>
// kernel: quadratic_self_attention.1
$region0: #{quadratic_self_attention.1}
  #allocation0 [shape = 'u32[]', space=smem, size = 0x4, offset = 0x4, fixed_abs, tag = 'smem constant byte address 0x4 - core index']
  #allocation1 [shape = 'u32[144,128]{1,0:T(1,128)}', space=vmem, size = 0x12000, scoped, tag = 'internal scratch']
  %s0 = inlined_call_operand.hbm [shape: f32[32,64], index: 0, kind: input, shape index: {}]
  %s1 = inlined_call_operand.hbm [shape: f32[64,320], index: 1, kind: input, shape index: {}]
  %s2 = inlined_call_operand.vmem [shape: f32[1,320], index: 2, kind: input, shape index: {}]
  %s3 = inlined_call_operand.hbm [shape: f32[64,64], index: 3, kind: input, shape index: {}]
  %s4 = inlined_call_operand.vmem [shape: f32[1,64], index: 4, kind: input, shape index: {}]
  %s5 = inlined_call_operand.hbm [shape: f32[32,64], index: 5, kind: input, shape index: {}]
  %s6 = inlined_call_operand.hbm [shape: f32[32,64], index: 6, kind: input, shape index: {}]
  %s7 = inlined_call_operand.vmem [shape: f32[16,128], index: 7, kind: output, shape index: {}]
  %s8 = sld [smem:[#allocation0]]
  $region58: #{quadratic_self_attention.1} parent=0
    _
  %s10 = ssub.s32 1, %s8
  %s11 = scalar_select 0, %s10, %s8
  $region1: #{quadratic_self_attention.1} parent=0
    #allocation2 [shape = 'u8[16384]{0}', space=vmem, size = 0x4000, scoped, tag = 'input window, operand 0, single buffered']
    #allocation3 [shape = 's32[1]{0}', space=sflag, size = 0x4, scoped, tag = 'scoped memory for quadratic_self_attention.1']
    #allocation4 [shape = 'u8[98304]{0}', space=vmem, size = 0x18000, scoped, tag = 'input window, operand 1, single buffered']
    #allocation5 [shape = 's32[1]{0}', space=sflag, size = 0x4, scoped, tag = 'scoped memory for quadratic_self_attention.1']
    #allocation6 [shape = 'u8[32768]{0}', space=vmem, size = 0x8000, scoped, tag = 'input window, operand 3, single buffered']
    #allocation7 [shape = 'u8[16384]{0}', space=vmem, size = 0x4000, scoped, tag = 'input window, operand 5, single buffered']
    #allocation8 [shape = 's32[1]{0}', space=sflag, size = 0x4, scoped, tag = 'scoped memory for quadratic_self_attention.1']
    #allocation9 [shape = 'u8[16384]{0}', space=vmem, size = 0x4000, scoped, tag = 'input window, operand 6, single buffered']
    %12 = vsyncpa [#allocation3], 0
    %13 = vsyncpa [#allocation5], 0
    %14 = vsyncpa [#allocation8], 0
    // Predicated region
    $region2: #{quadratic_self_attention.1} parent=1 // pred_check
      _
    $region3: #{quadratic_self_attention.1} parent=1 // pred_check_branch
      %16 = sbr.rel (0) target = $region5
    $region4: #{quadratic_self_attention.1} parent=1 // pred_region
      %s18 = ssub.s32 512, 512
      %19 = vsyncadd [#allocation3], %s18
      %s20 = sshll.u32 [#allocation2], 4
      %s21 = int_to_ptr.vmem [resolvable:$true] %s20
      %26 = dma.hbm_to_vmem [thread:$0]  %s0, 512, %s21, [#allocation3], 128, 128, 8
    $region5: #{quadratic_self_attention.1} parent=1 // pred_fallthru
      _
    // Predicated region
    $region6: #{quadratic_self_attention.1} parent=1 // pred_check
      _
    $region7: #{quadratic_self_attention.1} parent=1 // pred_check_branch
      %28 = sbr.rel (0) target = $region9
    $region8: #{quadratic_self_attention.1} parent=1 // pred_region
      %s30 = ssub.s32 3072, 3072
      %31 = vsyncadd [#allocation5], %s30
      %s32 = sshll.u32 [#allocation4], 4
      %s33 = int_to_ptr.vmem [resolvable:$true] %s32
      %38 = dma.hbm_to_vmem [thread:$0]  %s1, 3072, %s33, [#allocation5], 384, 384, 24
    $region9: #{quadratic_self_attention.1} parent=1 // pred_fallthru
      _
    // Predicated region
    $region10: #{quadratic_self_attention.1} parent=1 // pred_check
      _
    $region11: #{quadratic_self_attention.1} parent=1 // pred_check_branch
      %40 = sbr.rel (0) target = $region13
    $region12: #{quadratic_self_attention.1} parent=1 // pred_region
      _
    $region13: #{quadratic_self_attention.1} parent=1 // pred_fallthru
      _
    // Predicated region
    $region14: #{quadratic_self_attention.1} parent=1 // pred_check
      _
    $region15: #{quadratic_self_attention.1} parent=1 // pred_check_branch
      %42 = sbr.rel (0) target = $region17
    $region16: #{quadratic_self_attention.1} parent=1 // pred_region
      %s44 = ssub.s32 1024, 1024
      %45 = vsyncadd [#allocation5], %s44
      %s46 = sshll.u32 [#allocation6], 4
      %s47 = int_to_ptr.vmem [resolvable:$true] %s46
      %52 = dma.hbm_to_vmem [thread:$0]  %s3, 1024, %s47, [#allocation5], 128, 128, 8
    $region17: #{quadratic_self_attention.1} parent=1 // pred_fallthru
      _
    // Predicated region
    $region18: #{quadratic_self_attention.1} parent=1 // pred_check
      _
    $region19: #{quadratic_self_attention.1} parent=1 // pred_check_branch
      %54 = sbr.rel (0) target = $region21
    $region20: #{quadratic_self_attention.1} parent=1 // pred_region
      _
    $region21: #{quadratic_self_attention.1} parent=1 // pred_fallthru
      _
    // Predicated region
    $region22: #{quadratic_self_attention.1} parent=1 // pred_check
      _
    $region23: #{quadratic_self_attention.1} parent=1 // pred_check_branch
      %56 = sbr.rel (0) target = $region25
    $region24: #{quadratic_self_attention.1} parent=1 // pred_region
      %s58 = ssub.s32 512, 512
      %59 = vsyncadd [#allocation8], %s58
      %s60 = sshll.u32 [#allocation7], 4
      %s61 = int_to_ptr.vmem [resolvable:$true] %s60
      %66 = dma.hbm_to_vmem [thread:$0]  %s5, 512, %s61, [#allocation8], 128, 128, 8
    $region25: #{quadratic_self_attention.1} parent=1 // pred_fallthru
      _
    // Predicated region
    $region26: #{quadratic_self_attention.1} parent=1 // pred_check
      _
    $region27: #{quadratic_self_attention.1} parent=1 // pred_check_branch
      %68 = sbr.rel (0) target = $region29
    $region28: #{quadratic_self_attention.1} parent=1 // pred_region
      %s70 = ssub.s32 512, 512
      %71 = vsyncadd [#allocation8], %s70
      %s72 = sshll.u32 [#allocation9], 4
      %s73 = int_to_ptr.vmem [resolvable:$true] %s72
      %78 = dma.hbm_to_vmem [thread:$0]  %s6, 512, %s73, [#allocation8], 128, 128, 8
    $region29: #{quadratic_self_attention.1} parent=1 // pred_fallthru
      _
    // Predicated region
    $region30: #{quadratic_self_attention.1} parent=1 // pred_check
      _
    $region31: #{quadratic_self_attention.1} parent=1 // pred_check_branch
      %80 = sbr.rel (0) target = $region33
    $region32: #{quadratic_self_attention.1} parent=1 // pred_region
      %81 = dma.done [#allocation3], 512
    $region33: #{quadratic_self_attention.1} parent=1 // pred_fallthru
      _
    // Predicated region
    $region34: #{quadratic_self_attention.1} parent=1 // pred_check
      _
    $region35: #{quadratic_self_attention.1} parent=1 // pred_check_branch
      %83 = sbr.rel (0) target = $region37
    $region36: #{quadratic_self_attention.1} parent=1 // pred_region
      %84 = dma.done [#allocation5], 3072
    $region37: #{quadratic_self_attention.1} parent=1 // pred_fallthru
      _
    // Predicated region
    $region38: #{quadratic_self_attention.1} parent=1 // pred_check
      _
    $region39: #{quadratic_self_attention.1} parent=1 // pred_check_branch
      %86 = sbr.rel (0) target = $region41
    $region40: #{quadratic_self_attention.1} parent=1 // pred_region
      %87 = dma.done [#allocation5], 1024
    $region41: #{quadratic_self_attention.1} parent=1 // pred_fallthru
      _
    // Predicated region
    $region42: #{quadratic_self_attention.1} parent=1 // pred_check
      _
    $region43: #{quadratic_self_attention.1} parent=1 // pred_check_branch
      %89 = sbr.rel (0) target = $region45
    $region44: #{quadratic_self_attention.1} parent=1 // pred_region
      %90 = dma.done [#allocation8], 512
    $region45: #{quadratic_self_attention.1} parent=1 // pred_fallthru
      _
    // Predicated region
    $region46: #{quadratic_self_attention.1} parent=1 // pred_check
      _
    $region47: #{quadratic_self_attention.1} parent=1 // pred_check_branch
      %92 = sbr.rel (0) target = $region49
    $region48: #{quadratic_self_attention.1} parent=1 // pred_region
      %93 = dma.done [#allocation8], 512
    $region49: #{quadratic_self_attention.1} parent=1 // pred_fallthru
      _
    %v94 = vld [vmem:[#allocation2] sm:$0xff]
    %v95 = vld [vmem:[#allocation2 + $0x8] sm:$0xff]
    %v96 = vld [vmem:[#allocation2 + $0x10] sm:$0xff]
    %v97 = vld [vmem:[#allocation2 + $0x18] sm:$0xff]
    %v98 = vld [vmem:[#allocation4] sm:$0xff]
    %v99 = vld [vmem:[#allocation4 + $0x8] sm:$0xff]
    %v100 = vld [vmem:[#allocation4 + $0x10] sm:$0xff]
    %v101 = vld [vmem:[#allocation4 + $0x18] sm:$0xff]
    %v102 = vld [vmem:[#allocation4 + $0x20] sm:$0xff]
    %v103 = vld [vmem:[#allocation4 + $0x28] sm:$0xff]
    %v104 = vld [vmem:[#allocation4 + $0x30] sm:$0xff]
    %v105 = vld [vmem:[#allocation4 + $0x38] sm:$0xff]
    %v106 = vld [vmem:[#allocation4 + $0x40] sm:$0xff]
    %v107 = vld [vmem:[#allocation4 + $0x48] sm:$0xff]
    %v108 = vld [vmem:[#allocation4 + $0x50] sm:$0xff]
    %v109 = vld [vmem:[#allocation4 + $0x58] sm:$0xff]
    %v110 = vld [vmem:[#allocation4 + $0x60] sm:$0xff]
    %v111 = vld [vmem:[#allocation4 + $0x68] sm:$0xff]
    %v112 = vld [vmem:[#allocation4 + $0x70] sm:$0xff]
    %v113 = vld [vmem:[#allocation4 + $0x78] sm:$0xff]
    %v114 = vld [vmem:[#allocation4 + $0x80] sm:$0xff]
    %v115 = vld [vmem:[#allocation4 + $0x88] sm:$0xff]
    %v116 = vld [vmem:[#allocation4 + $0x90] sm:$0xff]
    %v117 = vld [vmem:[#allocation4 + $0x98] sm:$0xff]
    %v118 = vld [vmem:[#allocation4 + $0xa0] sm:$0xff]
    %v119 = vld [vmem:[#allocation4 + $0xa8] sm:$0xff]
    %v120 = vld [vmem:[#allocation4 + $0xb0] sm:$0xff]
    %v121 = vld [vmem:[#allocation4 + $0xb8] sm:$0xff]
    %v122 = vld [vmem:[%s2] sm:$0x7]
    %v124 = vlaneseq
    %v125 = vshrl.u32 %v124, 7
    %v126 = vsub.s32 0, %v125
    %v127 = vrot.slane %v122, %v126
    %v128 = vlaneseq
    %v129 = vshrl.u32 %v128, 7
    %v130 = vsub.s32 1, %v129
    %v131 = vrot.slane %v122, %v130
    %v132 = vlaneseq
    %v133 = vshrl.u32 %v132, 7
    %v134 = vsub.s32 2, %v133
    %v135 = vrot.slane %v122, %v134
    %vm139 = vcmask 523264
    %v141 = vsel %vm139, %v94, 0
    %v144 = vsel %vm139, %v95, 0
    %v147 = vsel %vm139, %v96, 0
    %v150 = vsel %vm139, %v97, 0
    %152 = vmatprep.subr.mxu0 %v99
    %153 = vmatpush1.msra.mxu0 %v98
    %154 = vmatprep.subr.mxu0 %v102
    %155 = vmatpush1.msra.mxu0 %v101
    %156 = vmatprep.subr.mxu0 %v105
    %157 = vmatpush1.msra.mxu0 %v104
    %158 = vmatprep.subr.mxu0 %v108
    %159 = vmatpush1.msra.mxu0 %v107
    %160 = vmatprep.subr.mxu0 %v111
    %161 = vmatpush1.msra.mxu0 %v110
    %162 = vmatprep.subr.mxu0 %v114
    %163 = vmatpush1.msra.mxu0 %v113
    %164 = vmatprep.subr.mxu0 %v117
    %165 = vmatpush1.msra.mxu0 %v116
    %166 = vmatprep.subr.mxu0 %v120
    %167 = vmatpush1.msra.mxu0 %v119
    %168 = vmatprep.subr.mxu0 0.0
    %169 = vmatpush1.msra.mxu0 0.0
    %170 = vmatprep.subr.mxu0 0.0
    %171 = vmatpush1.msra.mxu0 0.0
    %172 = vmatprep.subr.mxu0 0.0
    %173 = vmatpush1.msra.mxu0 0.0
    %174 = vmatprep.subr.mxu0 0.0
    %175 = vmatpush1.msra.mxu0 0.0
    %176 = vmatprep.subr.mxu0 0.0
    %177 = vmatpush1.msra.mxu0 0.0
    %178 = vmatprep.subr.mxu0 0.0
    %179 = vmatpush1.msra.mxu0 0.0
    %180 = vmatprep.subr.mxu0 0.0
    %181 = vmatpush1.msra.mxu0 0.0
    %182 = vmatprep.subr.mxu0 0.0
    %183 = vmatpush1.msra.mxu0 0.0
    %184 = vmatprep.subr.mxu0 0.0
    %185 = vmatpush1.msra.mxu0 0.0
    %186 = vmatprep.subr.mxu0 0.0
    %187 = vmatpush1.msra.mxu0 0.0
    %188 = vmatprep.subr.mxu0 0.0
    %189 = vmatpush1.msra.mxu0 0.0
    %190 = vmatprep.subr.mxu0 0.0
    %191 = vmatpush1.msra.mxu0 0.0
    %192 = vmatprep.subr.mxu0 0.0
    %193 = vmatpush1.msra.mxu0 0.0
    %194 = vmatprep.subr.mxu0 0.0
    %195 = vmatpush1.msra.mxu0 0.0
    %196 = vmatprep.subr.mxu0 0.0
    %197 = vmatpush1.msra.mxu0 0.0
    %198 = vmatprep.subr.mxu0 0.0
    %199 = vmatpush1.msra.mxu0 0.0
    %200 = vmatprep.subr.mxu0 0.0
    %201 = vmatpush1.msra.mxu0 0.0
    %202 = vmatprep.subr.mxu0 0.0
    %203 = vmatpush1.msra.mxu0 0.0
    %204 = vmatprep.subr.mxu0 0.0
    %205 = vmatpush1.msra.mxu0 0.0
    %206 = vmatprep.subr.mxu0 0.0
    %207 = vmatpush1.msra.mxu0 0.0
    %208 = vmatprep.subr.mxu0 0.0
    %209 = vmatpush1.msra.mxu0 0.0
    %210 = vmatprep.subr.mxu0 0.0
    %211 = vmatpush1.msra.mxu0 0.0
    %212 = vmatprep.subr.mxu0 0.0
    %213 = vmatpush1.msra.mxu0 0.0
    %214 = vmatprep.subr.mxu0 0.0
    %215 = vmatpush1.msra.mxu0 0.0
    %216 = vmatprep.mubr.f32.mxu0 0.0
    %217 = vmatmul.mubr.f32.gmra.mrb[0].mxu0 %v141
    %v218 = vpop.f32.mrb[0].mxu0
    %v219 = vadd.f32 %v127, %v218
    %v220 = vpop.f32.mrb[0].mxu0
    %v221 = vadd.f32 %v131, %v220
    %222 = vmatprep.mubr.f32.mxu0 0.0
    %223 = vmatmul.mubr.f32.gmra.mrb[0].mxu0 %v144
    %v224 = vpop.f32.mrb[0].mxu0
    %v225 = vadd.f32 %v127, %v224
    %v226 = vpop.f32.mrb[0].mxu0
    %v227 = vadd.f32 %v131, %v226
    %228 = vmatprep.mubr.f32.mxu0 0.0
    %229 = vmatmul.mubr.f32.gmra.mrb[0].mxu0 %v147
    %v230 = vpop.f32.mrb[0].mxu0
    %v231 = vadd.f32 %v127, %v230
    %v232 = vpop.f32.mrb[0].mxu0
    %v233 = vadd.f32 %v131, %v232
    %234 = vmatprep.mubr.f32.mxu0 0.0
    %235 = vmatmul.mubr.f32.gmra.mrb[0].mxu0 %v150
    %v236 = vpop.f32.mrb[0].mxu0
    %v237 = vadd.f32 %v127, %v236
    %v238 = vpop.f32.mrb[0].mxu0
    %v239 = vadd.f32 %v131, %v238
    %240 = vdwg.mxu0
    %241 = vmatprep.subr.mxu0 0.0
    %242 = vmatpush1.msra.mxu0 %v100
    %243 = vmatprep.subr.mxu0 0.0
    %244 = vmatpush1.msra.mxu0 %v103
    %245 = vmatprep.subr.mxu0 0.0
    %246 = vmatpush1.msra.mxu0 %v106
    %247 = vmatprep.subr.mxu0 0.0
    %248 = vmatpush1.msra.mxu0 %v109
    %249 = vmatprep.subr.mxu0 0.0
    %250 = vmatpush1.msra.mxu0 %v112
    %251 = vmatprep.subr.mxu0 0.0
    %252 = vmatpush1.msra.mxu0 %v115
    %253 = vmatprep.subr.mxu0 0.0
    %254 = vmatpush1.msra.mxu0 %v118
    %255 = vmatprep.subr.mxu0 0.0
    %256 = vmatpush1.msra.mxu0 %v121
    %257 = vmatprep.subr.mxu0 0.0
    %258 = vmatpush1.msra.mxu0 0.0
    %259 = vmatprep.subr.mxu0 0.0
    %260 = vmatpush1.msra.mxu0 0.0
    %261 = vmatprep.subr.mxu0 0.0
    %262 = vmatpush1.msra.mxu0 0.0
    %263 = vmatprep.subr.mxu0 0.0
    %264 = vmatpush1.msra.mxu0 0.0
    %265 = vmatprep.subr.mxu0 0.0
    %266 = vmatpush1.msra.mxu0 0.0
    %267 = vmatprep.subr.mxu0 0.0
    %268 = vmatpush1.msra.mxu0 0.0
    %269 = vmatprep.subr.mxu0 0.0
    %270 = vmatpush1.msra.mxu0 0.0
    %271 = vmatprep.subr.mxu0 0.0
    %272 = vmatpush1.msra.mxu0 0.0
    %273 = vmatprep.subr.mxu0 0.0
    %274 = vmatpush1.msra.mxu0 0.0
    %275 = vmatprep.subr.mxu0 0.0
    %276 = vmatpush1.msra.mxu0 0.0
    %277 = vmatprep.subr.mxu0 0.0
    %278 = vmatpush1.msra.mxu0 0.0
    %279 = vmatprep.subr.mxu0 0.0
    %280 = vmatpush1.msra.mxu0 0.0
    %281 = vmatprep.subr.mxu0 0.0
    %282 = vmatpush1.msra.mxu0 0.0
    %283 = vmatprep.subr.mxu0 0.0
    %284 = vmatpush1.msra.mxu0 0.0
    %285 = vmatprep.subr.mxu0 0.0
    %286 = vmatpush1.msra.mxu0 0.0
    %287 = vmatprep.subr.mxu0 0.0
    %288 = vmatpush1.msra.mxu0 0.0
    %289 = vmatprep.subr.mxu0 0.0
    %290 = vmatpush1.msra.mxu0 0.0
    %291 = vmatprep.subr.mxu0 0.0
    %292 = vmatpush1.msra.mxu0 0.0
    %293 = vmatprep.subr.mxu0 0.0
    %294 = vmatpush1.msra.mxu0 0.0
    %295 = vmatprep.subr.mxu0 0.0
    %296 = vmatpush1.msra.mxu0 0.0
    %297 = vmatprep.subr.mxu0 0.0
    %298 = vmatpush1.msra.mxu0 0.0
    %299 = vmatprep.subr.mxu0 0.0
    %300 = vmatpush1.msra.mxu0 0.0
    %301 = vmatprep.subr.mxu0 0.0
    %302 = vmatpush1.msra.mxu0 0.0
    %303 = vmatprep.subr.mxu0 0.0
    %304 = vmatpush1.msra.mxu0 0.0
    %305 = vmatprep.mubr.f32.mxu0 0.0
    %306 = vmatmul.mubr.f32.gmra.mrb[0].mxu0 %v141
    %v307 = vpop.f32.mrb[0].mxu0
    %v308 = vadd.f32 %v135, %v307
    %v309 = vpop.f32.mrb[0].mxu0
    %310 = vmatprep.mubr.f32.mxu0 0.0
    %311 = vmatmul.mubr.f32.gmra.mrb[0].mxu0 %v144
    %v312 = vpop.f32.mrb[0].mxu0
    %v313 = vadd.f32 %v135, %v312
    %v314 = vpop.f32.mrb[0].mxu0
    %315 = vmatprep.mubr.f32.mxu0 0.0
    %316 = vmatmul.mubr.f32.gmra.mrb[0].mxu0 %v147
    %v317 = vpop.f32.mrb[0].mxu0
    %v318 = vadd.f32 %v135, %v317
    %v319 = vpop.f32.mrb[0].mxu0
    %320 = vmatprep.mubr.f32.mxu0 0.0
    %321 = vmatmul.mubr.f32.gmra.mrb[0].mxu0 %v150
    %v322 = vpop.f32.mrb[0].mxu0
    %v323 = vadd.f32 %v135, %v322
    %v324 = vpop.f32.mrb[0].mxu0
    %325 = vdwg.mxu0
    %v326 = vld [vmem:[#allocation7] sm:$0xff]
    %v327 = vld [vmem:[#allocation7 + $0x8] sm:$0xff]
    %v328 = vld [vmem:[#allocation7 + $0x10] sm:$0xff]
    %v329 = vld [vmem:[#allocation7 + $0x18] sm:$0xff]
    %v330 = vld [vmem:[#allocation9] sm:$0xff]
    %v331 = vld [vmem:[#allocation9 + $0x8] sm:$0xff]
    %v332 = vld [vmem:[#allocation9 + $0x10] sm:$0xff]
    %v333 = vld [vmem:[#allocation9 + $0x18] sm:$0xff]
    %v334 = vmul.f32 %v219, %v326
    %v335 = vmul.f32 %v225, %v327
    %v336 = vmul.f32 %v231, %v328
    %v337 = vmul.f32 %v237, %v329
    %342 = vrot.lane.b32.xlu0 %v330, 64
    %v343 = vpop.permute.xlu0 %342
    %344 = vrot.lane.b32.xlu0 %v331, 64
    %v345 = vpop.permute.xlu0 %344
    %346 = vrot.lane.b32.xlu0 %v332, 64
    %v347 = vpop.permute.xlu0 %346
    %348 = vrot.lane.b32.xlu0 %v333, 64
    %v349 = vpop.permute.xlu0 %348
    %v354 = vmul.f32 %v219, %v343
    %v355 = vmul.f32 %v225, %v345
    %v356 = vmul.f32 %v231, %v347
    %v357 = vmul.f32 %v237, %v349
    %362 = vrot.lane.b32.xlu0 %v354, 64
    %v363 = vpop.permute.xlu0 %362
    %364 = vrot.lane.b32.xlu0 %v355, 64
    %v365 = vpop.permute.xlu0 %364
    %366 = vrot.lane.b32.xlu0 %v356, 64
    %v367 = vpop.permute.xlu0 %366
    %368 = vrot.lane.b32.xlu0 %v357, 64
    %v369 = vpop.permute.xlu0 %368
    %v374 = vadd.f32 %v334, %v363
    %v375 = vadd.f32 %v335, %v365
    %v376 = vadd.f32 %v336, %v367
    %v377 = vadd.f32 %v337, %v369
    %v378 = vmul.f32 %v221, %v326
    %v379 = vmul.f32 %v227, %v327
    %v380 = vmul.f32 %v233, %v328
    %v381 = vmul.f32 %v239, %v329
    %v382 = vmul.f32 %v221, %v343
    %v383 = vmul.f32 %v227, %v345
    %v384 = vmul.f32 %v233, %v347
    %v385 = vmul.f32 %v239, %v349
    %390 = vrot.lane.b32.xlu0 %v382, 64
    %v391 = vpop.permute.xlu0 %390
    %392 = vrot.lane.b32.xlu0 %v383, 64
    %v393 = vpop.permute.xlu0 %392
    %394 = vrot.lane.b32.xlu0 %v384, 64
    %v395 = vpop.permute.xlu0 %394
    %396 = vrot.lane.b32.xlu0 %v385, 64
    %v397 = vpop.permute.xlu0 %396
    %v402 = vadd.f32 %v378, %v391
    %v403 = vadd.f32 %v379, %v393
    %v404 = vadd.f32 %v380, %v395
    %v405 = vadd.f32 %v381, %v397
    %vm406 = vcmask 130048
    %v408 = vsel %vm406, %v374, 0
    %v411 = vsel %vm406, %v375, 0
    %v414 = vsel %vm406, %v402, 0
    %v417 = vsel %vm406, %v403, 0
    %419 = vmatprep.subr.mxu0 0.0
    %420 = vmatpush1.xpose.msra.mxu0 %v414
    %421 = vmatprep.subr.mxu0 0.0
    %422 = vmatpush1.xpose.msra.mxu0 %v417
    %423 = vmatprep.subr.mxu0 0.0
    %424 = vmatpush1.xpose.msra.mxu0 0.0
    %425 = vmatprep.subr.mxu0 0.0
    %426 = vmatpush1.xpose.msra.mxu0 0.0
    %427 = vmatprep.subr.mxu0 0.0
    %428 = vmatpush1.xpose.msra.mxu0 0.0
    %429 = vmatprep.subr.mxu0 0.0
    %430 = vmatpush1.xpose.msra.mxu0 0.0
    %431 = vmatprep.subr.mxu0 0.0
    %432 = vmatpush1.xpose.msra.mxu0 0.0
    %433 = vmatprep.subr.mxu0 0.0
    %434 = vmatpush1.xpose.msra.mxu0 0.0
    %435 = vmatprep.subr.mxu0 0.0
    %436 = vmatpush1.xpose.msra.mxu0 0.0
    %437 = vmatprep.subr.mxu0 0.0
    %438 = vmatpush1.xpose.msra.mxu0 0.0
    %439 = vmatprep.subr.mxu0 0.0
    %440 = vmatpush1.xpose.msra.mxu0 0.0
    %441 = vmatprep.subr.mxu0 0.0
    %442 = vmatpush1.xpose.msra.mxu0 0.0
    %443 = vmatprep.subr.mxu0 0.0
    %444 = vmatpush1.xpose.msra.mxu0 0.0
    %445 = vmatprep.subr.mxu0 0.0
    %446 = vmatpush1.xpose.msra.mxu0 0.0
    %447 = vmatprep.subr.mxu0 0.0
    %448 = vmatpush1.xpose.msra.mxu0 0.0
    %449 = vmatprep.subr.mxu0 0.0
    %450 = vmatpush1.xpose.msra.mxu0 0.0
    %451 = vmatprep.subr.mxu0 0.0
    %452 = vmatpush1.xpose.msra.mxu0 0.0
    %453 = vmatprep.subr.mxu0 0.0
    %454 = vmatpush1.xpose.msra.mxu0 0.0
    %455 = vmatprep.subr.mxu0 0.0
    %456 = vmatpush1.xpose.msra.mxu0 0.0
    %457 = vmatprep.subr.mxu0 0.0
    %458 = vmatpush1.xpose.msra.mxu0 0.0
    %459 = vmatprep.subr.mxu0 0.0
    %460 = vmatpush1.xpose.msra.mxu0 0.0
    %461 = vmatprep.subr.mxu0 0.0
    %462 = vmatpush1.xpose.msra.mxu0 0.0
    %463 = vmatprep.subr.mxu0 0.0
    %464 = vmatpush1.xpose.msra.mxu0 0.0
    %465 = vmatprep.subr.mxu0 0.0
    %466 = vmatpush1.xpose.msra.mxu0 0.0
    %467 = vmatprep.subr.mxu0 0.0
    %468 = vmatpush1.xpose.msra.mxu0 0.0
    %469 = vmatprep.subr.mxu0 0.0
    %470 = vmatpush1.xpose.msra.mxu0 0.0
    %471 = vmatprep.subr.mxu0 0.0
    %472 = vmatpush1.xpose.msra.mxu0 0.0
    %473 = vmatprep.subr.mxu0 0.0
    %474 = vmatpush1.xpose.msra.mxu0 0.0
    %475 = vmatprep.subr.mxu0 0.0
    %476 = vmatpush1.xpose.msra.mxu0 0.0
    %477 = vmatprep.subr.mxu0 0.0
    %478 = vmatpush1.xpose.msra.mxu0 0.0
    %479 = vmatprep.subr.mxu0 0.0
    %480 = vmatpush1.xpose.msra.mxu0 0.0
    %481 = vmatprep.subr.mxu0 0.0
    %482 = vmatpush1.xpose.msra.mxu0 0.0
    %483 = vmatprep.mubr.f32.mxu0 0.0
    %484 = vmatmul.mubr.f32.gmra.mrb[0].mxu0 %v408
    %v485 = vpop.f32.mrb[0].mxu0
    %v486 = vadd.f32 0.0, %v485
    %v487 = vpop.f32.mrb[0].mxu0
    %488 = vmatprep.mubr.f32.mxu0 0.0
    %489 = vmatmul.mubr.f32.gmra.mrb[0].mxu0 %v411
    %v490 = vpop.f32.mrb[0].mxu0
    %v491 = vadd.f32 0.0, %v490
    %v492 = vpop.f32.mrb[0].mxu0
    %493 = vdwg.mxu0
    %v494 = vsel %vm406, %v486, -inf
    %495 = vmax.xlane.f32.xlu0 %v494
    %v496 = vpop.xlane.xlu0 %495
    %v497 = vsel %vm406, %v491, -inf
    %498 = vmax.xlane.f32.xlu0 %v497
    %v499 = vpop.xlane.xlu0 %498
    %v500 = vsub.f32 %v486, %v496
    %v501 = vsub.f32 %v491, %v499
    %v502 = vmul.f32 %v500, 1.442695
    %v503 = vpow.pop %v502
    %v504 = vmul.f32 %v501, 1.442695
    %v505 = vpow.pop %v504
    %v506 = vsel %vm406, %v503, 0.0
    %507 = vadd.xlane.f32.xlu0 %v506
    %v508 = vpop.xlane.xlu0 %507
    %v509 = vsel %vm406, %v505, 0.0
    %510 = vadd.xlane.f32.xlu0 %v509
    %v511 = vpop.xlane.xlu0 %510
    %v512 = vrcp.pop %v508
    %v513 = vmul.f32 %v503, %v512
    %v514 = vrcp.pop %v511
    %v515 = vmul.f32 %v505, %v514
    %v517 = vsel %vm406, %v513, 0
    %v520 = vsel %vm406, %v515, 0
    %522 = vmatprep.subr.mxu0 0.0
    %523 = vmatpush1.msra.mxu0 %v308
    %524 = vmatprep.subr.mxu0 0.0
    %525 = vmatpush1.msra.mxu0 %v313
    %526 = vmatprep.subr.mxu0 0.0
    %527 = vmatpush1.msra.mxu0 0.0
    %528 = vmatprep.subr.mxu0 0.0
    %529 = vmatpush1.msra.mxu0 0.0
    %530 = vmatprep.subr.mxu0 0.0
    %531 = vmatpush1.msra.mxu0 0.0
    %532 = vmatprep.subr.mxu0 0.0
    %533 = vmatpush1.msra.mxu0 0.0
    %534 = vmatprep.subr.mxu0 0.0
    %535 = vmatpush1.msra.mxu0 0.0
    %536 = vmatprep.subr.mxu0 0.0
    %537 = vmatpush1.msra.mxu0 0.0
    %538 = vmatprep.subr.mxu0 0.0
    %539 = vmatpush1.msra.mxu0 0.0
    %540 = vmatprep.subr.mxu0 0.0
    %541 = vmatpush1.msra.mxu0 0.0
    %542 = vmatprep.subr.mxu0 0.0
    %543 = vmatpush1.msra.mxu0 0.0
    %544 = vmatprep.subr.mxu0 0.0
    %545 = vmatpush1.msra.mxu0 0.0
    %546 = vmatprep.subr.mxu0 0.0
    %547 = vmatpush1.msra.mxu0 0.0
    %548 = vmatprep.subr.mxu0 0.0
    %549 = vmatpush1.msra.mxu0 0.0
    %550 = vmatprep.subr.mxu0 0.0
    %551 = vmatpush1.msra.mxu0 0.0
    %552 = vmatprep.subr.mxu0 0.0
    %553 = vmatpush1.msra.mxu0 0.0
    %554 = vmatprep.subr.mxu0 0.0
    %555 = vmatpush1.msra.mxu0 0.0
    %556 = vmatprep.subr.mxu0 0.0
    %557 = vmatpush1.msra.mxu0 0.0
    %558 = vmatprep.subr.mxu0 0.0
    %559 = vmatpush1.msra.mxu0 0.0
    %560 = vmatprep.subr.mxu0 0.0
    %561 = vmatpush1.msra.mxu0 0.0
    %562 = vmatprep.subr.mxu0 0.0
    %563 = vmatpush1.msra.mxu0 0.0
    %564 = vmatprep.subr.mxu0 0.0
    %565 = vmatpush1.msra.mxu0 0.0
    %566 = vmatprep.subr.mxu0 0.0
    %567 = vmatpush1.msra.mxu0 0.0
    %568 = vmatprep.subr.mxu0 0.0
    %569 = vmatpush1.msra.mxu0 0.0
    %570 = vmatprep.subr.mxu0 0.0
    %571 = vmatpush1.msra.mxu0 0.0
    %572 = vmatprep.subr.mxu0 0.0
    %573 = vmatpush1.msra.mxu0 0.0
    %574 = vmatprep.subr.mxu0 0.0
    %575 = vmatpush1.msra.mxu0 0.0
    %576 = vmatprep.subr.mxu0 0.0
    %577 = vmatpush1.msra.mxu0 0.0
    %578 = vmatprep.subr.mxu0 0.0
    %579 = vmatpush1.msra.mxu0 0.0
    %580 = vmatprep.subr.mxu0 0.0
    %581 = vmatpush1.msra.mxu0 0.0
    %582 = vmatprep.subr.mxu0 0.0
    %583 = vmatpush1.msra.mxu0 0.0
    %584 = vmatprep.subr.mxu0 0.0
    %585 = vmatpush1.msra.mxu0 0.0
    %586 = vmatprep.mubr.f32.mxu0 0.0
    %587 = vmatmul.mubr.f32.gmra.mrb[0].mxu0 %v517
    %v588 = vpop.f32.mrb[0].mxu0
    %v589 = vadd.f32 0.0, %v588
    %v590 = vpop.f32.mrb[0].mxu0
    %591 = vmatprep.mubr.f32.mxu0 0.0
    %592 = vmatmul.mubr.f32.gmra.mrb[0].mxu0 %v520
    %v593 = vpop.f32.mrb[0].mxu0
    %v594 = vadd.f32 0.0, %v593
    %v595 = vpop.f32.mrb[0].mxu0
    %596 = vdwg.mxu0
    %597 = vrot.lane.b32.xlu0 %v374, 112
    %v598 = vpop.permute.xlu0 %597
    %599 = vrot.lane.b32.xlu0 %v375, 112
    %v600 = vpop.permute.xlu0 %599
    %601 = vrot.lane.b32.xlu0 %v402, 112
    %v602 = vpop.permute.xlu0 %601
    %603 = vrot.lane.b32.xlu0 %v403, 112
    %v604 = vpop.permute.xlu0 %603
    %v605 = vsel %vm406, %v598, 0
    %v607 = vsel %vm406, %v600, 0
    %v609 = vsel %vm406, %v602, 0
    %v611 = vsel %vm406, %v604, 0
    %613 = vmatprep.subr.mxu0 0.0
    %614 = vmatpush1.xpose.msra.mxu0 %v609
    %615 = vmatprep.subr.mxu0 0.0
    %616 = vmatpush1.xpose.msra.mxu0 %v611
    %617 = vmatprep.subr.mxu0 0.0
    %618 = vmatpush1.xpose.msra.mxu0 0.0
    %619 = vmatprep.subr.mxu0 0.0
    %620 = vmatpush1.xpose.msra.mxu0 0.0
    %621 = vmatprep.subr.mxu0 0.0
    %622 = vmatpush1.xpose.msra.mxu0 0.0
    %623 = vmatprep.subr.mxu0 0.0
    %624 = vmatpush1.xpose.msra.mxu0 0.0
    %625 = vmatprep.subr.mxu0 0.0
    %626 = vmatpush1.xpose.msra.mxu0 0.0
    %627 = vmatprep.subr.mxu0 0.0
    %628 = vmatpush1.xpose.msra.mxu0 0.0
    %629 = vmatprep.subr.mxu0 0.0
    %630 = vmatpush1.xpose.msra.mxu0 0.0
    %631 = vmatprep.subr.mxu0 0.0
    %632 = vmatpush1.xpose.msra.mxu0 0.0
    %633 = vmatprep.subr.mxu0 0.0
    %634 = vmatpush1.xpose.msra.mxu0 0.0
    %635 = vmatprep.subr.mxu0 0.0
    %636 = vmatpush1.xpose.msra.mxu0 0.0
    %637 = vmatprep.subr.mxu0 0.0
    %638 = vmatpush1.xpose.msra.mxu0 0.0
    %639 = vmatprep.subr.mxu0 0.0
    %640 = vmatpush1.xpose.msra.mxu0 0.0
    %641 = vmatprep.subr.mxu0 0.0
    %642 = vmatpush1.xpose.msra.mxu0 0.0
    %643 = vmatprep.subr.mxu0 0.0
    %644 = vmatpush1.xpose.msra.mxu0 0.0
    %645 = vmatprep.subr.mxu0 0.0
    %646 = vmatpush1.xpose.msra.mxu0 0.0
    %647 = vmatprep.subr.mxu0 0.0
    %648 = vmatpush1.xpose.msra.mxu0 0.0
    %649 = vmatprep.subr.mxu0 0.0
    %650 = vmatpush1.xpose.msra.mxu0 0.0
    %651 = vmatprep.subr.mxu0 0.0
    %652 = vmatpush1.xpose.msra.mxu0 0.0
    %653 = vmatprep.subr.mxu0 0.0
    %654 = vmatpush1.xpose.msra.mxu0 0.0
    %655 = vmatprep.subr.mxu0 0.0
    %656 = vmatpush1.xpose.msra.mxu0 0.0
    %657 = vmatprep.subr.mxu0 0.0
    %658 = vmatpush1.xpose.msra.mxu0 0.0
    %659 = vmatprep.subr.mxu0 0.0
    %660 = vmatpush1.xpose.msra.mxu0 0.0
    %661 = vmatprep.subr.mxu0 0.0
    %662 = vmatpush1.xpose.msra.mxu0 0.0
    %663 = vmatprep.subr.mxu0 0.0
    %664 = vmatpush1.xpose.msra.mxu0 0.0
    %665 = vmatprep.subr.mxu0 0.0
    %666 = vmatpush1.xpose.msra.mxu0 0.0
    %667 = vmatprep.subr.mxu0 0.0
    %668 = vmatpush1.xpose.msra.mxu0 0.0
    %669 = vmatprep.subr.mxu0 0.0
    %670 = vmatpush1.xpose.msra.mxu0 0.0
    %671 = vmatprep.subr.mxu0 0.0
    %672 = vmatpush1.xpose.msra.mxu0 0.0
    %673 = vmatprep.subr.mxu0 0.0
    %674 = vmatpush1.xpose.msra.mxu0 0.0
    %675 = vmatprep.subr.mxu0 0.0
    %676 = vmatpush1.xpose.msra.mxu0 0.0
    %677 = vmatprep.mubr.f32.mxu0 0.0
    %678 = vmatmul.mubr.f32.gmra.mrb[0].mxu0 %v605
    %v679 = vpop.f32.mrb[0].mxu0
    %v680 = vadd.f32 0.0, %v679
    %v681 = vpop.f32.mrb[0].mxu0
    %682 = vmatprep.mubr.f32.mxu0 0.0
    %683 = vmatmul.mubr.f32.gmra.mrb[0].mxu0 %v607
    %v684 = vpop.f32.mrb[0].mxu0
    %v685 = vadd.f32 0.0, %v684
    %v686 = vpop.f32.mrb[0].mxu0
    %687 = vdwg.mxu0
    %v688 = vsel %vm406, %v680, -inf
    %689 = vmax.xlane.f32.xlu0 %v688
    %v690 = vpop.xlane.xlu0 %689
    %v691 = vsel %vm406, %v685, -inf
    %692 = vmax.xlane.f32.xlu0 %v691
    %v693 = vpop.xlane.xlu0 %692
    %v694 = vsub.f32 %v680, %v690
    %v695 = vsub.f32 %v685, %v693
    %v696 = vmul.f32 %v694, 1.442695
    %v697 = vpow.pop %v696
    %v698 = vmul.f32 %v695, 1.442695
    %v699 = vpow.pop %v698
    %v700 = vsel %vm406, %v697, 0.0
    %701 = vadd.xlane.f32.xlu0 %v700
    %v702 = vpop.xlane.xlu0 %701
    %v703 = vsel %vm406, %v699, 0.0
    %704 = vadd.xlane.f32.xlu0 %v703
    %v705 = vpop.xlane.xlu0 %704
    %v706 = vrcp.pop %v702
    %v707 = vmul.f32 %v697, %v706
    %v708 = vrcp.pop %v705
    %v709 = vmul.f32 %v699, %v708
    %712 = vrot.lane.b32.xlu0 %v308, 112
    %v713 = vpop.permute.xlu0 %712
    %714 = vrot.lane.b32.xlu0 %v313, 112
    %v715 = vpop.permute.xlu0 %714
    %v719 = vsel %vm406, %v707, 0
    %v722 = vsel %vm406, %v709, 0
    %724 = vmatprep.subr.mxu0 0.0
    %725 = vmatpush1.msra.mxu0 %v713
    %726 = vmatprep.subr.mxu0 0.0
    %727 = vmatpush1.msra.mxu0 %v715
    %728 = vmatprep.subr.mxu0 0.0
    %729 = vmatpush1.msra.mxu0 0.0
    %730 = vmatprep.subr.mxu0 0.0
    %731 = vmatpush1.msra.mxu0 0.0
    %732 = vmatprep.subr.mxu0 0.0
    %733 = vmatpush1.msra.mxu0 0.0
    %734 = vmatprep.subr.mxu0 0.0
    %735 = vmatpush1.msra.mxu0 0.0
    %736 = vmatprep.subr.mxu0 0.0
    %737 = vmatpush1.msra.mxu0 0.0
    %738 = vmatprep.subr.mxu0 0.0
    %739 = vmatpush1.msra.mxu0 0.0
    %740 = vmatprep.subr.mxu0 0.0
    %741 = vmatpush1.msra.mxu0 0.0
    %742 = vmatprep.subr.mxu0 0.0
    %743 = vmatpush1.msra.mxu0 0.0
    %744 = vmatprep.subr.mxu0 0.0
    %745 = vmatpush1.msra.mxu0 0.0
    %746 = vmatprep.subr.mxu0 0.0
    %747 = vmatpush1.msra.mxu0 0.0
    %748 = vmatprep.subr.mxu0 0.0
    %749 = vmatpush1.msra.mxu0 0.0
    %750 = vmatprep.subr.mxu0 0.0
    %751 = vmatpush1.msra.mxu0 0.0
    %752 = vmatprep.subr.mxu0 0.0
    %753 = vmatpush1.msra.mxu0 0.0
    %754 = vmatprep.subr.mxu0 0.0
    %755 = vmatpush1.msra.mxu0 0.0
    %756 = vmatprep.subr.mxu0 0.0
    %757 = vmatpush1.msra.mxu0 0.0
    %758 = vmatprep.subr.mxu0 0.0
    %759 = vmatpush1.msra.mxu0 0.0
    %760 = vmatprep.subr.mxu0 0.0
    %761 = vmatpush1.msra.mxu0 0.0
    %762 = vmatprep.subr.mxu0 0.0
    %763 = vmatpush1.msra.mxu0 0.0
    %764 = vmatprep.subr.mxu0 0.0
    %765 = vmatpush1.msra.mxu0 0.0
    %766 = vmatprep.subr.mxu0 0.0
    %767 = vmatpush1.msra.mxu0 0.0
    %768 = vmatprep.subr.mxu0 0.0
    %769 = vmatpush1.msra.mxu0 0.0
    %770 = vmatprep.subr.mxu0 0.0
    %771 = vmatpush1.msra.mxu0 0.0
    %772 = vmatprep.subr.mxu0 0.0
    %773 = vmatpush1.msra.mxu0 0.0
    %774 = vmatprep.subr.mxu0 0.0
    %775 = vmatpush1.msra.mxu0 0.0
    %776 = vmatprep.subr.mxu0 0.0
    %777 = vmatpush1.msra.mxu0 0.0
    %778 = vmatprep.subr.mxu0 0.0
    %779 = vmatpush1.msra.mxu0 0.0
    %780 = vmatprep.subr.mxu0 0.0
    %781 = vmatpush1.msra.mxu0 0.0
    %782 = vmatprep.subr.mxu0 0.0
    %783 = vmatpush1.msra.mxu0 0.0
    %784 = vmatprep.subr.mxu0 0.0
    %785 = vmatpush1.msra.mxu0 0.0
    %786 = vmatprep.subr.mxu0 0.0
    %787 = vmatpush1.msra.mxu0 0.0
    %788 = vmatprep.mubr.f32.mxu0 0.0
    %789 = vmatmul.mubr.f32.gmra.mrb[0].mxu0 %v719
    %v790 = vpop.f32.mrb[0].mxu0
    %v791 = vadd.f32 0.0, %v790
    %v792 = vpop.f32.mrb[0].mxu0
    %793 = vmatprep.mubr.f32.mxu0 0.0
    %794 = vmatmul.mubr.f32.gmra.mrb[0].mxu0 %v722
    %v795 = vpop.f32.mrb[0].mxu0
    %v796 = vadd.f32 0.0, %v795
    %v797 = vpop.f32.mrb[0].mxu0
    %798 = vdwg.mxu0
    %799 = vrot.lane.b32.xlu0 %v374, 96
    %v800 = vpop.permute.xlu0 %799
    %801 = vrot.lane.b32.xlu0 %v375, 96
    %v802 = vpop.permute.xlu0 %801
    %803 = vrot.lane.b32.xlu0 %v402, 96
    %v804 = vpop.permute.xlu0 %803
    %805 = vrot.lane.b32.xlu0 %v403, 96
    %v806 = vpop.permute.xlu0 %805
    %v807 = vsel %vm406, %v800, 0
    %v809 = vsel %vm406, %v802, 0
    %v811 = vsel %vm406, %v804, 0
    %v813 = vsel %vm406, %v806, 0
    %815 = vmatprep.subr.mxu0 0.0
    %816 = vmatpush1.xpose.msra.mxu0 %v811
    %817 = vmatprep.subr.mxu0 0.0
    %818 = vmatpush1.xpose.msra.mxu0 %v813
    %819 = vmatprep.subr.mxu0 0.0
    %820 = vmatpush1.xpose.msra.mxu0 0.0
    %821 = vmatprep.subr.mxu0 0.0
    %822 = vmatpush1.xpose.msra.mxu0 0.0
    %823 = vmatprep.subr.mxu0 0.0
    %824 = vmatpush1.xpose.msra.mxu0 0.0
    %825 = vmatprep.subr.mxu0 0.0
    %826 = vmatpush1.xpose.msra.mxu0 0.0
    %827 = vmatprep.subr.mxu0 0.0
    %828 = vmatpush1.xpose.msra.mxu0 0.0
    %829 = vmatprep.subr.mxu0 0.0
    %830 = vmatpush1.xpose.msra.mxu0 0.0
    %831 = vmatprep.subr.mxu0 0.0
    %832 = vmatpush1.xpose.msra.mxu0 0.0
    %833 = vmatprep.subr.mxu0 0.0
    %834 = vmatpush1.xpose.msra.mxu0 0.0
    %835 = vmatprep.subr.mxu0 0.0
    %836 = vmatpush1.xpose.msra.mxu0 0.0
    %837 = vmatprep.subr.mxu0 0.0
    %838 = vmatpush1.xpose.msra.mxu0 0.0
    %839 = vmatprep.subr.mxu0 0.0
    %840 = vmatpush1.xpose.msra.mxu0 0.0
    %841 = vmatprep.subr.mxu0 0.0
    %842 = vmatpush1.xpose.msra.mxu0 0.0
    %843 = vmatprep.subr.mxu0 0.0
    %844 = vmatpush1.xpose.msra.mxu0 0.0
    %845 = vmatprep.subr.mxu0 0.0
    %846 = vmatpush1.xpose.msra.mxu0 0.0
    %847 = vmatprep.subr.mxu0 0.0
    %848 = vmatpush1.xpose.msra.mxu0 0.0
    %849 = vmatprep.subr.mxu0 0.0
    %850 = vmatpush1.xpose.msra.mxu0 0.0
    %851 = vmatprep.subr.mxu0 0.0
    %852 = vmatpush1.xpose.msra.mxu0 0.0
    %853 = vmatprep.subr.mxu0 0.0
    %854 = vmatpush1.xpose.msra.mxu0 0.0
    %855 = vmatprep.subr.mxu0 0.0
    %856 = vmatpush1.xpose.msra.mxu0 0.0
    %857 = vmatprep.subr.mxu0 0.0
    %858 = vmatpush1.xpose.msra.mxu0 0.0
    %859 = vmatprep.subr.mxu0 0.0
    %860 = vmatpush1.xpose.msra.mxu0 0.0
    %861 = vmatprep.subr.mxu0 0.0
    %862 = vmatpush1.xpose.msra.mxu0 0.0
    %863 = vmatprep.subr.mxu0 0.0
    %864 = vmatpush1.xpose.msra.mxu0 0.0
    %865 = vmatprep.subr.mxu0 0.0
    %866 = vmatpush1.xpose.msra.mxu0 0.0
    %867 = vmatprep.subr.mxu0 0.0
    %868 = vmatpush1.xpose.msra.mxu0 0.0
    %869 = vmatprep.subr.mxu0 0.0
    %870 = vmatpush1.xpose.msra.mxu0 0.0
    %871 = vmatprep.subr.mxu0 0.0
    %872 = vmatpush1.xpose.msra.mxu0 0.0
    %873 = vmatprep.subr.mxu0 0.0
    %874 = vmatpush1.xpose.msra.mxu0 0.0
    %875 = vmatprep.subr.mxu0 0.0
    %876 = vmatpush1.xpose.msra.mxu0 0.0
    %877 = vmatprep.subr.mxu0 0.0
    %878 = vmatpush1.xpose.msra.mxu0 0.0
    %879 = vmatprep.mubr.f32.mxu0 0.0
    %880 = vmatmul.mubr.f32.gmra.mrb[0].mxu0 %v807
    %v881 = vpop.f32.mrb[0].mxu0
    %v882 = vadd.f32 0.0, %v881
    %v883 = vpop.f32.mrb[0].mxu0
    %884 = vmatprep.mubr.f32.mxu0 0.0
    %885 = vmatmul.mubr.f32.gmra.mrb[0].mxu0 %v809
    %v886 = vpop.f32.mrb[0].mxu0
    %v887 = vadd.f32 0.0, %v886
    %v888 = vpop.f32.mrb[0].mxu0
    %889 = vdwg.mxu0
    %v890 = vsel %vm406, %v882, -inf
    %891 = vmax.xlane.f32.xlu0 %v890
    %v892 = vpop.xlane.xlu0 %891
    %v893 = vsel %vm406, %v887, -inf
    %894 = vmax.xlane.f32.xlu0 %v893
    %v895 = vpop.xlane.xlu0 %894
    %v896 = vsub.f32 %v882, %v892
    %v897 = vsub.f32 %v887, %v895
    %v898 = vmul.f32 %v896, 1.442695
    %v899 = vpow.pop %v898
    %v900 = vmul.f32 %v897, 1.442695
    %v901 = vpow.pop %v900
    %v902 = vsel %vm406, %v899, 0.0
    %903 = vadd.xlane.f32.xlu0 %v902
    %v904 = vpop.xlane.xlu0 %903
    %v905 = vsel %vm406, %v901, 0.0
    %906 = vadd.xlane.f32.xlu0 %v905
    %v907 = vpop.xlane.xlu0 %906
    %v908 = vrcp.pop %v904
    %v909 = vmul.f32 %v899, %v908
    %v910 = vrcp.pop %v907
    %v911 = vmul.f32 %v901, %v910
    %912 = vrot.lane.b32.xlu0 %v308, 96
    %v913 = vpop.permute.xlu0 %912
    %914 = vrot.lane.b32.xlu0 %v313, 96
    %v915 = vpop.permute.xlu0 %914
    %v919 = vsel %vm406, %v909, 0
    %v922 = vsel %vm406, %v911, 0
    %924 = vmatprep.subr.mxu0 0.0
    %925 = vmatpush1.msra.mxu0 %v913
    %926 = vmatprep.subr.mxu0 0.0
    %927 = vmatpush1.msra.mxu0 %v915
    %928 = vmatprep.subr.mxu0 0.0
    %929 = vmatpush1.msra.mxu0 0.0
    %930 = vmatprep.subr.mxu0 0.0
    %931 = vmatpush1.msra.mxu0 0.0
    %932 = vmatprep.subr.mxu0 0.0
    %933 = vmatpush1.msra.mxu0 0.0
    %934 = vmatprep.subr.mxu0 0.0
    %935 = vmatpush1.msra.mxu0 0.0
    %936 = vmatprep.subr.mxu0 0.0
    %937 = vmatpush1.msra.mxu0 0.0
    %938 = vmatprep.subr.mxu0 0.0
    %939 = vmatpush1.msra.mxu0 0.0
    %940 = vmatprep.subr.mxu0 0.0
    %941 = vmatpush1.msra.mxu0 0.0
    %942 = vmatprep.subr.mxu0 0.0
    %943 = vmatpush1.msra.mxu0 0.0
    %944 = vmatprep.subr.mxu0 0.0
    %945 = vmatpush1.msra.mxu0 0.0
    %946 = vmatprep.subr.mxu0 0.0
    %947 = vmatpush1.msra.mxu0 0.0
    %948 = vmatprep.subr.mxu0 0.0
    %949 = vmatpush1.msra.mxu0 0.0
    %950 = vmatprep.subr.mxu0 0.0
    %951 = vmatpush1.msra.mxu0 0.0
    %952 = vmatprep.subr.mxu0 0.0
    %953 = vmatpush1.msra.mxu0 0.0
    %954 = vmatprep.subr.mxu0 0.0
    %955 = vmatpush1.msra.mxu0 0.0
    %956 = vmatprep.subr.mxu0 0.0
    %957 = vmatpush1.msra.mxu0 0.0
    %958 = vmatprep.subr.mxu0 0.0
    %959 = vmatpush1.msra.mxu0 0.0
    %960 = vmatprep.subr.mxu0 0.0
    %961 = vmatpush1.msra.mxu0 0.0
    %962 = vmatprep.subr.mxu0 0.0
    %963 = vmatpush1.msra.mxu0 0.0
    %964 = vmatprep.subr.mxu0 0.0
    %965 = vmatpush1.msra.mxu0 0.0
    %966 = vmatprep.subr.mxu0 0.0
    %967 = vmatpush1.msra.mxu0 0.0
    %968 = vmatprep.subr.mxu0 0.0
    %969 = vmatpush1.msra.mxu0 0.0
    %970 = vmatprep.subr.mxu0 0.0
    %971 = vmatpush1.msra.mxu0 0.0
    %972 = vmatprep.subr.mxu0 0.0
    %973 = vmatpush1.msra.mxu0 0.0
    %974 = vmatprep.subr.mxu0 0.0
    %975 = vmatpush1.msra.mxu0 0.0
    %976 = vmatprep.subr.mxu0 0.0
    %977 = vmatpush1.msra.mxu0 0.0
    %978 = vmatprep.subr.mxu0 0.0
    %979 = vmatpush1.msra.mxu0 0.0
    %980 = vmatprep.subr.mxu0 0.0
    %981 = vmatpush1.msra.mxu0 0.0
    %982 = vmatprep.subr.mxu0 0.0
    %983 = vmatpush1.msra.mxu0 0.0
    %984 = vmatprep.subr.mxu0 0.0
    %985 = vmatpush1.msra.mxu0 0.0
    %986 = vmatprep.subr.mxu0 0.0
    %987 = vmatpush1.msra.mxu0 0.0
    %988 = vmatprep.mubr.f32.mxu0 0.0
    %989 = vmatmul.mubr.f32.gmra.mrb[0].mxu0 %v919
    %v990 = vpop.f32.mrb[0].mxu0
    %v991 = vadd.f32 0.0, %v990
    %v992 = vpop.f32.mrb[0].mxu0
    %993 = vmatprep.mubr.f32.mxu0 0.0
    %994 = vmatmul.mubr.f32.gmra.mrb[0].mxu0 %v922
    %v995 = vpop.f32.mrb[0].mxu0
    %v996 = vadd.f32 0.0, %v995
    %v997 = vpop.f32.mrb[0].mxu0
    %998 = vdwg.mxu0
    %999 = vrot.lane.b32.xlu0 %v374, 80
    %v1000 = vpop.permute.xlu0 %999
    %1001 = vrot.lane.b32.xlu0 %v375, 80
    %v1002 = vpop.permute.xlu0 %1001
    %1003 = vrot.lane.b32.xlu0 %v402, 80
    %v1004 = vpop.permute.xlu0 %1003
    %1005 = vrot.lane.b32.xlu0 %v403, 80
    %v1006 = vpop.permute.xlu0 %1005
    %v1007 = vsel %vm406, %v1000, 0
    %v1009 = vsel %vm406, %v1002, 0
    %v1011 = vsel %vm406, %v1004, 0
    %v1013 = vsel %vm406, %v1006, 0
    %1015 = vmatprep.subr.mxu0 0.0
    %1016 = vmatpush1.xpose.msra.mxu0 %v1011
    %1017 = vmatprep.subr.mxu0 0.0
    %1018 = vmatpush1.xpose.msra.mxu0 %v1013
    %1019 = vmatprep.subr.mxu0 0.0
    %1020 = vmatpush1.xpose.msra.mxu0 0.0
    %1021 = vmatprep.subr.mxu0 0.0
    %1022 = vmatpush1.xpose.msra.mxu0 0.0
    %1023 = vmatprep.subr.mxu0 0.0
    %1024 = vmatpush1.xpose.msra.mxu0 0.0
    %1025 = vmatprep.subr.mxu0 0.0
    %1026 = vmatpush1.xpose.msra.mxu0 0.0
    %1027 = vmatprep.subr.mxu0 0.0
    %1028 = vmatpush1.xpose.msra.mxu0 0.0
    %1029 = vmatprep.subr.mxu0 0.0
    %1030 = vmatpush1.xpose.msra.mxu0 0.0
    %1031 = vmatprep.subr.mxu0 0.0
    %1032 = vmatpush1.xpose.msra.mxu0 0.0
    %1033 = vmatprep.subr.mxu0 0.0
    %1034 = vmatpush1.xpose.msra.mxu0 0.0
    %1035 = vmatprep.subr.mxu0 0.0
    %1036 = vmatpush1.xpose.msra.mxu0 0.0
    %1037 = vmatprep.subr.mxu0 0.0
    %1038 = vmatpush1.xpose.msra.mxu0 0.0
    %1039 = vmatprep.subr.mxu0 0.0
    %1040 = vmatpush1.xpose.msra.mxu0 0.0
    %1041 = vmatprep.subr.mxu0 0.0
    %1042 = vmatpush1.xpose.msra.mxu0 0.0
    %1043 = vmatprep.subr.mxu0 0.0
    %1044 = vmatpush1.xpose.msra.mxu0 0.0
    %1045 = vmatprep.subr.mxu0 0.0
    %1046 = vmatpush1.xpose.msra.mxu0 0.0
    %1047 = vmatprep.subr.mxu0 0.0
    %1048 = vmatpush1.xpose.msra.mxu0 0.0
    %1049 = vmatprep.subr.mxu0 0.0
    %1050 = vmatpush1.xpose.msra.mxu0 0.0
    %1051 = vmatprep.subr.mxu0 0.0
    %1052 = vmatpush1.xpose.msra.mxu0 0.0
    %1053 = vmatprep.subr.mxu0 0.0
    %1054 = vmatpush1.xpose.msra.mxu0 0.0
    %1055 = vmatprep.subr.mxu0 0.0
    %1056 = vmatpush1.xpose.msra.mxu0 0.0
    %1057 = vmatprep.subr.mxu0 0.0
    %1058 = vmatpush1.xpose.msra.mxu0 0.0
    %1059 = vmatprep.subr.mxu0 0.0
    %1060 = vmatpush1.xpose.msra.mxu0 0.0
    %1061 = vmatprep.subr.mxu0 0.0
    %1062 = vmatpush1.xpose.msra.mxu0 0.0
    %1063 = vmatprep.subr.mxu0 0.0
    %1064 = vmatpush1.xpose.msra.mxu0 0.0
    %1065 = vmatprep.subr.mxu0 0.0
    %1066 = vmatpush1.xpose.msra.mxu0 0.0
    %1067 = vmatprep.subr.mxu0 0.0
    %1068 = vmatpush1.xpose.msra.mxu0 0.0
    %1069 = vmatprep.subr.mxu0 0.0
    %1070 = vmatpush1.xpose.msra.mxu0 0.0
    %1071 = vmatprep.subr.mxu0 0.0
    %1072 = vmatpush1.xpose.msra.mxu0 0.0
    %1073 = vmatprep.subr.mxu0 0.0
    %1074 = vmatpush1.xpose.msra.mxu0 0.0
    %1075 = vmatprep.subr.mxu0 0.0
    %1076 = vmatpush1.xpose.msra.mxu0 0.0
    %1077 = vmatprep.subr.mxu0 0.0
    %1078 = vmatpush1.xpose.msra.mxu0 0.0
    %1079 = vmatprep.mubr.f32.mxu0 0.0
    %1080 = vmatmul.mubr.f32.gmra.mrb[0].mxu0 %v1007
    %v1081 = vpop.f32.mrb[0].mxu0
    %v1082 = vadd.f32 0.0, %v1081
    %v1083 = vpop.f32.mrb[0].mxu0
    %1084 = vmatprep.mubr.f32.mxu0 0.0
    %1085 = vmatmul.mubr.f32.gmra.mrb[0].mxu0 %v1009
    %v1086 = vpop.f32.mrb[0].mxu0
    %v1087 = vadd.f32 0.0, %v1086
    %v1088 = vpop.f32.mrb[0].mxu0
    %1089 = vdwg.mxu0
    %v1090 = vsel %vm406, %v1082, -inf
    %1091 = vmax.xlane.f32.xlu0 %v1090
    %v1092 = vpop.xlane.xlu0 %1091
    %v1093 = vsel %vm406, %v1087, -inf
    %1094 = vmax.xlane.f32.xlu0 %v1093
    %v1095 = vpop.xlane.xlu0 %1094
    %v1096 = vsub.f32 %v1082, %v1092
    %v1097 = vsub.f32 %v1087, %v1095
    %v1098 = vmul.f32 %v1096, 1.442695
    %v1099 = vpow.pop %v1098
    %v1100 = vmul.f32 %v1097, 1.442695
    %v1101 = vpow.pop %v1100
    %v1102 = vsel %vm406, %v1099, 0.0
    %1103 = vadd.xlane.f32.xlu0 %v1102
    %v1104 = vpop.xlane.xlu0 %1103
    %v1105 = vsel %vm406, %v1101, 0.0
    %1106 = vadd.xlane.f32.xlu0 %v1105
    %v1107 = vpop.xlane.xlu0 %1106
    %v1108 = vrcp.pop %v1104
    %v1109 = vmul.f32 %v1099, %v1108
    %v1110 = vrcp.pop %v1107
    %v1111 = vmul.f32 %v1101, %v1110
    %1112 = vrot.lane.b32.xlu0 %v308, 80
    %v1113 = vpop.permute.xlu0 %1112
    %1114 = vrot.lane.b32.xlu0 %v313, 80
    %v1115 = vpop.permute.xlu0 %1114
    %v1119 = vsel %vm406, %v1109, 0
    %v1122 = vsel %vm406, %v1111, 0
    %1124 = vmatprep.subr.mxu0 0.0
    %1125 = vmatpush1.msra.mxu0 %v1113
    %1126 = vmatprep.subr.mxu0 0.0
    %1127 = vmatpush1.msra.mxu0 %v1115
    %1128 = vmatprep.subr.mxu0 0.0
    %1129 = vmatpush1.msra.mxu0 0.0
    %1130 = vmatprep.subr.mxu0 0.0
    %1131 = vmatpush1.msra.mxu0 0.0
    %1132 = vmatprep.subr.mxu0 0.0
    %1133 = vmatpush1.msra.mxu0 0.0
    %1134 = vmatprep.subr.mxu0 0.0
    %1135 = vmatpush1.msra.mxu0 0.0
    %1136 = vmatprep.subr.mxu0 0.0
    %1137 = vmatpush1.msra.mxu0 0.0
    %1138 = vmatprep.subr.mxu0 0.0
    %1139 = vmatpush1.msra.mxu0 0.0
    %1140 = vmatprep.subr.mxu0 0.0
    %1141 = vmatpush1.msra.mxu0 0.0
    %1142 = vmatprep.subr.mxu0 0.0
    %1143 = vmatpush1.msra.mxu0 0.0
    %1144 = vmatprep.subr.mxu0 0.0
    %1145 = vmatpush1.msra.mxu0 0.0
    %1146 = vmatprep.subr.mxu0 0.0
    %1147 = vmatpush1.msra.mxu0 0.0
    %1148 = vmatprep.subr.mxu0 0.0
    %1149 = vmatpush1.msra.mxu0 0.0
    %1150 = vmatprep.subr.mxu0 0.0
    %1151 = vmatpush1.msra.mxu0 0.0
    %1152 = vmatprep.subr.mxu0 0.0
    %1153 = vmatpush1.msra.mxu0 0.0
    %1154 = vmatprep.subr.mxu0 0.0
    %1155 = vmatpush1.msra.mxu0 0.0
    %1156 = vmatprep.subr.mxu0 0.0
    %1157 = vmatpush1.msra.mxu0 0.0
    %1158 = vmatprep.subr.mxu0 0.0
    %1159 = vmatpush1.msra.mxu0 0.0
    %1160 = vmatprep.subr.mxu0 0.0
    %1161 = vmatpush1.msra.mxu0 0.0
    %1162 = vmatprep.subr.mxu0 0.0
    %1163 = vmatpush1.msra.mxu0 0.0
    %1164 = vmatprep.subr.mxu0 0.0
    %1165 = vmatpush1.msra.mxu0 0.0
    %1166 = vmatprep.subr.mxu0 0.0
    %1167 = vmatpush1.msra.mxu0 0.0
    %1168 = vmatprep.subr.mxu0 0.0
    %1169 = vmatpush1.msra.mxu0 0.0
    %1170 = vmatprep.subr.mxu0 0.0
    %1171 = vmatpush1.msra.mxu0 0.0
    %1172 = vmatprep.subr.mxu0 0.0
    %1173 = vmatpush1.msra.mxu0 0.0
    %1174 = vmatprep.subr.mxu0 0.0
    %1175 = vmatpush1.msra.mxu0 0.0
    %1176 = vmatprep.subr.mxu0 0.0
    %1177 = vmatpush1.msra.mxu0 0.0
    %1178 = vmatprep.subr.mxu0 0.0
    %1179 = vmatpush1.msra.mxu0 0.0
    %1180 = vmatprep.subr.mxu0 0.0
    %1181 = vmatpush1.msra.mxu0 0.0
    %1182 = vmatprep.subr.mxu0 0.0
    %1183 = vmatpush1.msra.mxu0 0.0
    %1184 = vmatprep.subr.mxu0 0.0
    %1185 = vmatpush1.msra.mxu0 0.0
    %1186 = vmatprep.subr.mxu0 0.0
    %1187 = vmatpush1.msra.mxu0 0.0
    %1188 = vmatprep.mubr.f32.mxu0 0.0
    %1189 = vmatmul.mubr.f32.gmra.mrb[0].mxu0 %v1119
    %v1190 = vpop.f32.mrb[0].mxu0
    %v1191 = vadd.f32 0.0, %v1190
    %v1192 = vpop.f32.mrb[0].mxu0
    %1193 = vmatprep.mubr.f32.mxu0 0.0
    %1194 = vmatmul.mubr.f32.gmra.mrb[0].mxu0 %v1122
    %v1195 = vpop.f32.mrb[0].mxu0
    %v1196 = vadd.f32 0.0, %v1195
    %v1197 = vpop.f32.mrb[0].mxu0
    %1198 = vdwg.mxu0
    %1201 = vrot.lane.b32.xlu0 %v791, 16
    %v1202 = vpop.permute.xlu0 %1201
    %1203 = vrot.lane.b32.xlu0 %v796, 16
    %v1204 = vpop.permute.xlu0 %1203
    %1209 = vrot.lane.b32.xlu0 %v991, 32
    %v1210 = vpop.permute.xlu0 %1209
    %1211 = vrot.lane.b32.xlu0 %v996, 32
    %v1212 = vpop.permute.xlu0 %1211
    %1217 = vrot.lane.b32.xlu0 %v1191, 48
    %v1218 = vpop.permute.xlu0 %1217
    %1219 = vrot.lane.b32.xlu0 %v1196, 48
    %v1220 = vpop.permute.xlu0 %1219
    %v1223 = vsel %vm406, %v589, %v1202
    %v1224 = vsel %vm406, %v594, %v1204
    %vm1225 = vcmask 261120
    %v1226 = vsel %vm1225, %v1223, %v1210
    %v1227 = vsel %vm1225, %v1224, %v1212
    %vm1228 = vcmask 392192
    %v1229 = vsel %vm1228, %v1226, %v1218
    %v1230 = vsel %vm1228, %v1227, %v1220
    %v1232 = vsel %vm406, %v376, 0
    %v1235 = vsel %vm406, %v377, 0
    %v1238 = vsel %vm406, %v404, 0
    %v1241 = vsel %vm406, %v405, 0
    %1243 = vmatprep.subr.mxu0 0.0
    %1244 = vmatpush1.xpose.msra.mxu0 %v1238
    %1245 = vmatprep.subr.mxu0 0.0
    %1246 = vmatpush1.xpose.msra.mxu0 %v1241
    %1247 = vmatprep.subr.mxu0 0.0
    %1248 = vmatpush1.xpose.msra.mxu0 0.0
    %1249 = vmatprep.subr.mxu0 0.0
    %1250 = vmatpush1.xpose.msra.mxu0 0.0
    %1251 = vmatprep.subr.mxu0 0.0
    %1252 = vmatpush1.xpose.msra.mxu0 0.0
    %1253 = vmatprep.subr.mxu0 0.0
    %1254 = vmatpush1.xpose.msra.mxu0 0.0
    %1255 = vmatprep.subr.mxu0 0.0
    %1256 = vmatpush1.xpose.msra.mxu0 0.0
    %1257 = vmatprep.subr.mxu0 0.0
    %1258 = vmatpush1.xpose.msra.mxu0 0.0
    %1259 = vmatprep.subr.mxu0 0.0
    %1260 = vmatpush1.xpose.msra.mxu0 0.0
    %1261 = vmatprep.subr.mxu0 0.0
    %1262 = vmatpush1.xpose.msra.mxu0 0.0
    %1263 = vmatprep.subr.mxu0 0.0
    %1264 = vmatpush1.xpose.msra.mxu0 0.0
    %1265 = vmatprep.subr.mxu0 0.0
    %1266 = vmatpush1.xpose.msra.mxu0 0.0
    %1267 = vmatprep.subr.mxu0 0.0
    %1268 = vmatpush1.xpose.msra.mxu0 0.0
    %1269 = vmatprep.subr.mxu0 0.0
    %1270 = vmatpush1.xpose.msra.mxu0 0.0
    %1271 = vmatprep.subr.mxu0 0.0
    %1272 = vmatpush1.xpose.msra.mxu0 0.0
    %1273 = vmatprep.subr.mxu0 0.0
    %1274 = vmatpush1.xpose.msra.mxu0 0.0
    %1275 = vmatprep.subr.mxu0 0.0
    %1276 = vmatpush1.xpose.msra.mxu0 0.0
    %1277 = vmatprep.subr.mxu0 0.0
    %1278 = vmatpush1.xpose.msra.mxu0 0.0
    %1279 = vmatprep.subr.mxu0 0.0
    %1280 = vmatpush1.xpose.msra.mxu0 0.0
    %1281 = vmatprep.subr.mxu0 0.0
    %1282 = vmatpush1.xpose.msra.mxu0 0.0
    %1283 = vmatprep.subr.mxu0 0.0
    %1284 = vmatpush1.xpose.msra.mxu0 0.0
    %1285 = vmatprep.subr.mxu0 0.0
    %1286 = vmatpush1.xpose.msra.mxu0 0.0
    %1287 = vmatprep.subr.mxu0 0.0
    %1288 = vmatpush1.xpose.msra.mxu0 0.0
    %1289 = vmatprep.subr.mxu0 0.0
    %1290 = vmatpush1.xpose.msra.mxu0 0.0
    %1291 = vmatprep.subr.mxu0 0.0
    %1292 = vmatpush1.xpose.msra.mxu0 0.0
    %1293 = vmatprep.subr.mxu0 0.0
    %1294 = vmatpush1.xpose.msra.mxu0 0.0
    %1295 = vmatprep.subr.mxu0 0.0
    %1296 = vmatpush1.xpose.msra.mxu0 0.0
    %1297 = vmatprep.subr.mxu0 0.0
    %1298 = vmatpush1.xpose.msra.mxu0 0.0
    %1299 = vmatprep.subr.mxu0 0.0
    %1300 = vmatpush1.xpose.msra.mxu0 0.0
    %1301 = vmatprep.subr.mxu0 0.0
    %1302 = vmatpush1.xpose.msra.mxu0 0.0
    %1303 = vmatprep.subr.mxu0 0.0
    %1304 = vmatpush1.xpose.msra.mxu0 0.0
    %1305 = vmatprep.subr.mxu0 0.0
    %1306 = vmatpush1.xpose.msra.mxu0 0.0
    %1307 = vmatprep.mubr.f32.mxu0 0.0
    %1308 = vmatmul.mubr.f32.gmra.mrb[0].mxu0 %v1232
    %v1309 = vpop.f32.mrb[0].mxu0
    %v1310 = vadd.f32 0.0, %v1309
    %v1311 = vpop.f32.mrb[0].mxu0
    %1312 = vmatprep.mubr.f32.mxu0 0.0
    %1313 = vmatmul.mubr.f32.gmra.mrb[0].mxu0 %v1235
    %v1314 = vpop.f32.mrb[0].mxu0
    %v1315 = vadd.f32 0.0, %v1314
    %v1316 = vpop.f32.mrb[0].mxu0
    %1317 = vdwg.mxu0
    %v1318 = vsel %vm406, %v1310, -inf
    %1319 = vmax.xlane.f32.xlu0 %v1318
    %v1320 = vpop.xlane.xlu0 %1319
    %v1321 = vsel %vm406, %v1315, -inf
    %1322 = vmax.xlane.f32.xlu0 %v1321
    %v1323 = vpop.xlane.xlu0 %1322
    %v1324 = vsub.f32 %v1310, %v1320
    %v1325 = vsub.f32 %v1315, %v1323
    %v1326 = vmul.f32 %v1324, 1.442695
    %v1327 = vpow.pop %v1326
    %v1328 = vmul.f32 %v1325, 1.442695
    %v1329 = vpow.pop %v1328
    %v1330 = vsel %vm406, %v1327, 0.0
    %1331 = vadd.xlane.f32.xlu0 %v1330
    %v1332 = vpop.xlane.xlu0 %1331
    %v1333 = vsel %vm406, %v1329, 0.0
    %1334 = vadd.xlane.f32.xlu0 %v1333
    %v1335 = vpop.xlane.xlu0 %1334
    %v1336 = vrcp.pop %v1332
    %v1337 = vmul.f32 %v1327, %v1336
    %v1338 = vrcp.pop %v1335
    %v1339 = vmul.f32 %v1329, %v1338
    %v1341 = vsel %vm406, %v1337, 0
    %v1344 = vsel %vm406, %v1339, 0
    %1346 = vmatprep.subr.mxu0 0.0
    %1347 = vmatpush1.msra.mxu0 %v318
    %1348 = vmatprep.subr.mxu0 0.0
    %1349 = vmatpush1.msra.mxu0 %v323
    %1350 = vmatprep.subr.mxu0 0.0
    %1351 = vmatpush1.msra.mxu0 0.0
    %1352 = vmatprep.subr.mxu0 0.0
    %1353 = vmatpush1.msra.mxu0 0.0
    %1354 = vmatprep.subr.mxu0 0.0
    %1355 = vmatpush1.msra.mxu0 0.0
    %1356 = vmatprep.subr.mxu0 0.0
    %1357 = vmatpush1.msra.mxu0 0.0
    %1358 = vmatprep.subr.mxu0 0.0
    %1359 = vmatpush1.msra.mxu0 0.0
    %1360 = vmatprep.subr.mxu0 0.0
    %1361 = vmatpush1.msra.mxu0 0.0
    %1362 = vmatprep.subr.mxu0 0.0
    %1363 = vmatpush1.msra.mxu0 0.0
    %1364 = vmatprep.subr.mxu0 0.0
    %1365 = vmatpush1.msra.mxu0 0.0
    %1366 = vmatprep.subr.mxu0 0.0
    %1367 = vmatpush1.msra.mxu0 0.0
    %1368 = vmatprep.subr.mxu0 0.0
    %1369 = vmatpush1.msra.mxu0 0.0
    %1370 = vmatprep.subr.mxu0 0.0
    %1371 = vmatpush1.msra.mxu0 0.0
    %1372 = vmatprep.subr.mxu0 0.0
    %1373 = vmatpush1.msra.mxu0 0.0
    %1374 = vmatprep.subr.mxu0 0.0
    %1375 = vmatpush1.msra.mxu0 0.0
    %1376 = vmatprep.subr.mxu0 0.0
    %1377 = vmatpush1.msra.mxu0 0.0
    %1378 = vmatprep.subr.mxu0 0.0
    %1379 = vmatpush1.msra.mxu0 0.0
    %1380 = vmatprep.subr.mxu0 0.0
    %1381 = vmatpush1.msra.mxu0 0.0
    %1382 = vmatprep.subr.mxu0 0.0
    %1383 = vmatpush1.msra.mxu0 0.0
    %1384 = vmatprep.subr.mxu0 0.0
    %1385 = vmatpush1.msra.mxu0 0.0
    %1386 = vmatprep.subr.mxu0 0.0
    %1387 = vmatpush1.msra.mxu0 0.0
    %1388 = vmatprep.subr.mxu0 0.0
    %1389 = vmatpush1.msra.mxu0 0.0
    %1390 = vmatprep.subr.mxu0 0.0
    %1391 = vmatpush1.msra.mxu0 0.0
    %1392 = vmatprep.subr.mxu0 0.0
    %1393 = vmatpush1.msra.mxu0 0.0
    %1394 = vmatprep.subr.mxu0 0.0
    %1395 = vmatpush1.msra.mxu0 0.0
    %1396 = vmatprep.subr.mxu0 0.0
    %1397 = vmatpush1.msra.mxu0 0.0
    %1398 = vmatprep.subr.mxu0 0.0
    %1399 = vmatpush1.msra.mxu0 0.0
    %1400 = vmatprep.subr.mxu0 0.0
    %1401 = vmatpush1.msra.mxu0 0.0
    %1402 = vmatprep.subr.mxu0 0.0
    %1403 = vmatpush1.msra.mxu0 0.0
    %1404 = vmatprep.subr.mxu0 0.0
    %1405 = vmatpush1.msra.mxu0 0.0
    %1406 = vmatprep.subr.mxu0 0.0
    %1407 = vmatpush1.msra.mxu0 0.0
    %1408 = vmatprep.subr.mxu0 0.0
    %1409 = vmatpush1.msra.mxu0 0.0
    %1410 = vmatprep.mubr.f32.mxu0 0.0
    %1411 = vmatmul.mubr.f32.gmra.mrb[0].mxu0 %v1341
    %v1412 = vpop.f32.mrb[0].mxu0
    %v1413 = vadd.f32 0.0, %v1412
    %v1414 = vpop.f32.mrb[0].mxu0
    %1415 = vmatprep.mubr.f32.mxu0 0.0
    %1416 = vmatmul.mubr.f32.gmra.mrb[0].mxu0 %v1344
    %v1417 = vpop.f32.mrb[0].mxu0
    %v1418 = vadd.f32 0.0, %v1417
    %v1419 = vpop.f32.mrb[0].mxu0
    %1420 = vdwg.mxu0
    %1421 = vrot.lane.b32.xlu0 %v376, 112
    %v1422 = vpop.permute.xlu0 %1421
    %1423 = vrot.lane.b32.xlu0 %v377, 112
    %v1424 = vpop.permute.xlu0 %1423
    %1425 = vrot.lane.b32.xlu0 %v404, 112
    %v1426 = vpop.permute.xlu0 %1425
    %1427 = vrot.lane.b32.xlu0 %v405, 112
    %v1428 = vpop.permute.xlu0 %1427
    %v1429 = vsel %vm406, %v1422, 0
    %v1431 = vsel %vm406, %v1424, 0
    %v1433 = vsel %vm406, %v1426, 0
    %v1435 = vsel %vm406, %v1428, 0
    %1437 = vmatprep.subr.mxu0 0.0
    %1438 = vmatpush1.xpose.msra.mxu0 %v1433
    %1439 = vmatprep.subr.mxu0 0.0
    %1440 = vmatpush1.xpose.msra.mxu0 %v1435
    %1441 = vmatprep.subr.mxu0 0.0
    %1442 = vmatpush1.xpose.msra.mxu0 0.0
    %1443 = vmatprep.subr.mxu0 0.0
    %1444 = vmatpush1.xpose.msra.mxu0 0.0
    %1445 = vmatprep.subr.mxu0 0.0
    %1446 = vmatpush1.xpose.msra.mxu0 0.0
    %1447 = vmatprep.subr.mxu0 0.0
    %1448 = vmatpush1.xpose.msra.mxu0 0.0
    %1449 = vmatprep.subr.mxu0 0.0
    %1450 = vmatpush1.xpose.msra.mxu0 0.0
    %1451 = vmatprep.subr.mxu0 0.0
    %1452 = vmatpush1.xpose.msra.mxu0 0.0
    %1453 = vmatprep.subr.mxu0 0.0
    %1454 = vmatpush1.xpose.msra.mxu0 0.0
    %1455 = vmatprep.subr.mxu0 0.0
    %1456 = vmatpush1.xpose.msra.mxu0 0.0
    %1457 = vmatprep.subr.mxu0 0.0
    %1458 = vmatpush1.xpose.msra.mxu0 0.0
    %1459 = vmatprep.subr.mxu0 0.0
    %1460 = vmatpush1.xpose.msra.mxu0 0.0
    %1461 = vmatprep.subr.mxu0 0.0
    %1462 = vmatpush1.xpose.msra.mxu0 0.0
    %1463 = vmatprep.subr.mxu0 0.0
    %1464 = vmatpush1.xpose.msra.mxu0 0.0
    %1465 = vmatprep.subr.mxu0 0.0
    %1466 = vmatpush1.xpose.msra.mxu0 0.0
    %1467 = vmatprep.subr.mxu0 0.0
    %1468 = vmatpush1.xpose.msra.mxu0 0.0
    %1469 = vmatprep.subr.mxu0 0.0
    %1470 = vmatpush1.xpose.msra.mxu0 0.0
    %1471 = vmatprep.subr.mxu0 0.0
    %1472 = vmatpush1.xpose.msra.mxu0 0.0
    %1473 = vmatprep.subr.mxu0 0.0
    %1474 = vmatpush1.xpose.msra.mxu0 0.0
    %1475 = vmatprep.subr.mxu0 0.0
    %1476 = vmatpush1.xpose.msra.mxu0 0.0
    %1477 = vmatprep.subr.mxu0 0.0
    %1478 = vmatpush1.xpose.msra.mxu0 0.0
    %1479 = vmatprep.subr.mxu0 0.0
    %1480 = vmatpush1.xpose.msra.mxu0 0.0
    %1481 = vmatprep.subr.mxu0 0.0
    %1482 = vmatpush1.xpose.msra.mxu0 0.0
    %1483 = vmatprep.subr.mxu0 0.0
    %1484 = vmatpush1.xpose.msra.mxu0 0.0
    %1485 = vmatprep.subr.mxu0 0.0
    %1486 = vmatpush1.xpose.msra.mxu0 0.0
    %1487 = vmatprep.subr.mxu0 0.0
    %1488 = vmatpush1.xpose.msra.mxu0 0.0
    %1489 = vmatprep.subr.mxu0 0.0
    %1490 = vmatpush1.xpose.msra.mxu0 0.0
    %1491 = vmatprep.subr.mxu0 0.0
    %1492 = vmatpush1.xpose.msra.mxu0 0.0
    %1493 = vmatprep.subr.mxu0 0.0
    %1494 = vmatpush1.xpose.msra.mxu0 0.0
    %1495 = vmatprep.subr.mxu0 0.0
    %1496 = vmatpush1.xpose.msra.mxu0 0.0
    %1497 = vmatprep.subr.mxu0 0.0
    %1498 = vmatpush1.xpose.msra.mxu0 0.0
    %1499 = vmatprep.subr.mxu0 0.0
    %1500 = vmatpush1.xpose.msra.mxu0 0.0
    %1501 = vmatprep.mubr.f32.mxu0 0.0
    %1502 = vmatmul.mubr.f32.gmra.mrb[0].mxu0 %v1429
    %v1503 = vpop.f32.mrb[0].mxu0
    %v1504 = vadd.f32 0.0, %v1503
    %v1505 = vpop.f32.mrb[0].mxu0
    %1506 = vmatprep.mubr.f32.mxu0 0.0
    %1507 = vmatmul.mubr.f32.gmra.mrb[0].mxu0 %v1431
    %v1508 = vpop.f32.mrb[0].mxu0
    %v1509 = vadd.f32 0.0, %v1508
    %v1510 = vpop.f32.mrb[0].mxu0
    %1511 = vdwg.mxu0
    %v1512 = vsel %vm406, %v1504, -inf
    %1513 = vmax.xlane.f32.xlu0 %v1512
    %v1514 = vpop.xlane.xlu0 %1513
    %v1515 = vsel %vm406, %v1509, -inf
    %1516 = vmax.xlane.f32.xlu0 %v1515
    %v1517 = vpop.xlane.xlu0 %1516
    %v1518 = vsub.f32 %v1504, %v1514
    %v1519 = vsub.f32 %v1509, %v1517
    %v1520 = vmul.f32 %v1518, 1.442695
    %v1521 = vpow.pop %v1520
    %v1522 = vmul.f32 %v1519, 1.442695
    %v1523 = vpow.pop %v1522
    %v1524 = vsel %vm406, %v1521, 0.0
    %1525 = vadd.xlane.f32.xlu0 %v1524
    %v1526 = vpop.xlane.xlu0 %1525
    %v1527 = vsel %vm406, %v1523, 0.0
    %1528 = vadd.xlane.f32.xlu0 %v1527
    %v1529 = vpop.xlane.xlu0 %1528
    %v1530 = vrcp.pop %v1526
    %v1531 = vmul.f32 %v1521, %v1530
    %v1532 = vrcp.pop %v1529
    %v1533 = vmul.f32 %v1523, %v1532
    %1536 = vrot.lane.b32.xlu0 %v318, 112
    %v1537 = vpop.permute.xlu0 %1536
    %1538 = vrot.lane.b32.xlu0 %v323, 112
    %v1539 = vpop.permute.xlu0 %1538
    %v1543 = vsel %vm406, %v1531, 0
    %v1546 = vsel %vm406, %v1533, 0
    %1548 = vmatprep.subr.mxu0 0.0
    %1549 = vmatpush1.msra.mxu0 %v1537
    %1550 = vmatprep.subr.mxu0 0.0
    %1551 = vmatpush1.msra.mxu0 %v1539
    %1552 = vmatprep.subr.mxu0 0.0
    %1553 = vmatpush1.msra.mxu0 0.0
    %1554 = vmatprep.subr.mxu0 0.0
    %1555 = vmatpush1.msra.mxu0 0.0
    %1556 = vmatprep.subr.mxu0 0.0
    %1557 = vmatpush1.msra.mxu0 0.0
    %1558 = vmatprep.subr.mxu0 0.0
    %1559 = vmatpush1.msra.mxu0 0.0
    %1560 = vmatprep.subr.mxu0 0.0
    %1561 = vmatpush1.msra.mxu0 0.0
    %1562 = vmatprep.subr.mxu0 0.0
    %1563 = vmatpush1.msra.mxu0 0.0
    %1564 = vmatprep.subr.mxu0 0.0
    %1565 = vmatpush1.msra.mxu0 0.0
    %1566 = vmatprep.subr.mxu0 0.0
    %1567 = vmatpush1.msra.mxu0 0.0
    %1568 = vmatprep.subr.mxu0 0.0
    %1569 = vmatpush1.msra.mxu0 0.0
    %1570 = vmatprep.subr.mxu0 0.0
    %1571 = vmatpush1.msra.mxu0 0.0
    %1572 = vmatprep.subr.mxu0 0.0
    %1573 = vmatpush1.msra.mxu0 0.0
    %1574 = vmatprep.subr.mxu0 0.0
    %1575 = vmatpush1.msra.mxu0 0.0
    %1576 = vmatprep.subr.mxu0 0.0
    %1577 = vmatpush1.msra.mxu0 0.0
    %1578 = vmatprep.subr.mxu0 0.0
    %1579 = vmatpush1.msra.mxu0 0.0
    %1580 = vmatprep.subr.mxu0 0.0
    %1581 = vmatpush1.msra.mxu0 0.0
    %1582 = vmatprep.subr.mxu0 0.0
    %1583 = vmatpush1.msra.mxu0 0.0
    %1584 = vmatprep.subr.mxu0 0.0
    %1585 = vmatpush1.msra.mxu0 0.0
    %1586 = vmatprep.subr.mxu0 0.0
    %1587 = vmatpush1.msra.mxu0 0.0
    %1588 = vmatprep.subr.mxu0 0.0
    %1589 = vmatpush1.msra.mxu0 0.0
    %1590 = vmatprep.subr.mxu0 0.0
    %1591 = vmatpush1.msra.mxu0 0.0
    %1592 = vmatprep.subr.mxu0 0.0
    %1593 = vmatpush1.msra.mxu0 0.0
    %1594 = vmatprep.subr.mxu0 0.0
    %1595 = vmatpush1.msra.mxu0 0.0
    %1596 = vmatprep.subr.mxu0 0.0
    %1597 = vmatpush1.msra.mxu0 0.0
    %1598 = vmatprep.subr.mxu0 0.0
    %1599 = vmatpush1.msra.mxu0 0.0
    %1600 = vmatprep.subr.mxu0 0.0
    %1601 = vmatpush1.msra.mxu0 0.0
    %1602 = vmatprep.subr.mxu0 0.0
    %1603 = vmatpush1.msra.mxu0 0.0
    %1604 = vmatprep.subr.mxu0 0.0
    %1605 = vmatpush1.msra.mxu0 0.0
    %1606 = vmatprep.subr.mxu0 0.0
    %1607 = vmatpush1.msra.mxu0 0.0
    %1608 = vmatprep.subr.mxu0 0.0
    %1609 = vmatpush1.msra.mxu0 0.0
    %1610 = vmatprep.subr.mxu0 0.0
    %1611 = vmatpush1.msra.mxu0 0.0
    %1612 = vmatprep.mubr.f32.mxu0 0.0
    %1613 = vmatmul.mubr.f32.gmra.mrb[0].mxu0 %v1543
    %v1614 = vpop.f32.mrb[0].mxu0
    %v1615 = vadd.f32 0.0, %v1614
    %v1616 = vpop.f32.mrb[0].mxu0
    %1617 = vmatprep.mubr.f32.mxu0 0.0
    %1618 = vmatmul.mubr.f32.gmra.mrb[0].mxu0 %v1546
    %v1619 = vpop.f32.mrb[0].mxu0
    %v1620 = vadd.f32 0.0, %v1619
    %v1621 = vpop.f32.mrb[0].mxu0
    %1622 = vdwg.mxu0
    %1623 = vrot.lane.b32.xlu0 %v376, 96
    %v1624 = vpop.permute.xlu0 %1623
    %1625 = vrot.lane.b32.xlu0 %v377, 96
    %v1626 = vpop.permute.xlu0 %1625
    %1627 = vrot.lane.b32.xlu0 %v404, 96
    %v1628 = vpop.permute.xlu0 %1627
    %1629 = vrot.lane.b32.xlu0 %v405, 96
    %v1630 = vpop.permute.xlu0 %1629
    %v1631 = vsel %vm406, %v1624, 0
    %v1633 = vsel %vm406, %v1626, 0
    %v1635 = vsel %vm406, %v1628, 0
    %v1637 = vsel %vm406, %v1630, 0
    %1639 = vmatprep.subr.mxu0 0.0
    %1640 = vmatpush1.xpose.msra.mxu0 %v1635
    %1641 = vmatprep.subr.mxu0 0.0
    %1642 = vmatpush1.xpose.msra.mxu0 %v1637
    %1643 = vmatprep.subr.mxu0 0.0
    %1644 = vmatpush1.xpose.msra.mxu0 0.0
    %1645 = vmatprep.subr.mxu0 0.0
    %1646 = vmatpush1.xpose.msra.mxu0 0.0
    %1647 = vmatprep.subr.mxu0 0.0
    %1648 = vmatpush1.xpose.msra.mxu0 0.0
    %1649 = vmatprep.subr.mxu0 0.0
    %1650 = vmatpush1.xpose.msra.mxu0 0.0
    %1651 = vmatprep.subr.mxu0 0.0
    %1652 = vmatpush1.xpose.msra.mxu0 0.0
    %1653 = vmatprep.subr.mxu0 0.0
    %1654 = vmatpush1.xpose.msra.mxu0 0.0
    %1655 = vmatprep.subr.mxu0 0.0
    %1656 = vmatpush1.xpose.msra.mxu0 0.0
    %1657 = vmatprep.subr.mxu0 0.0
    %1658 = vmatpush1.xpose.msra.mxu0 0.0
    %1659 = vmatprep.subr.mxu0 0.0
    %1660 = vmatpush1.xpose.msra.mxu0 0.0
    %1661 = vmatprep.subr.mxu0 0.0
    %1662 = vmatpush1.xpose.msra.mxu0 0.0
    %1663 = vmatprep.subr.mxu0 0.0
    %1664 = vmatpush1.xpose.msra.mxu0 0.0
    %1665 = vmatprep.subr.mxu0 0.0
    %1666 = vmatpush1.xpose.msra.mxu0 0.0
    %1667 = vmatprep.subr.mxu0 0.0
    %1668 = vmatpush1.xpose.msra.mxu0 0.0
    %1669 = vmatprep.subr.mxu0 0.0
    %1670 = vmatpush1.xpose.msra.mxu0 0.0
    %1671 = vmatprep.subr.mxu0 0.0
    %1672 = vmatpush1.xpose.msra.mxu0 0.0
    %1673 = vmatprep.subr.mxu0 0.0
    %1674 = vmatpush1.xpose.msra.mxu0 0.0
    %1675 = vmatprep.subr.mxu0 0.0
    %1676 = vmatpush1.xpose.msra.mxu0 0.0
    %1677 = vmatprep.subr.mxu0 0.0
    %1678 = vmatpush1.xpose.msra.mxu0 0.0
    %1679 = vmatprep.subr.mxu0 0.0
    %1680 = vmatpush1.xpose.msra.mxu0 0.0
    %1681 = vmatprep.subr.mxu0 0.0
    %1682 = vmatpush1.xpose.msra.mxu0 0.0
    %1683 = vmatprep.subr.mxu0 0.0
    %1684 = vmatpush1.xpose.msra.mxu0 0.0
    %1685 = vmatprep.subr.mxu0 0.0
    %1686 = vmatpush1.xpose.msra.mxu0 0.0
    %1687 = vmatprep.subr.mxu0 0.0
    %1688 = vmatpush1.xpose.msra.mxu0 0.0
    %1689 = vmatprep.subr.mxu0 0.0
    %1690 = vmatpush1.xpose.msra.mxu0 0.0
    %1691 = vmatprep.subr.mxu0 0.0
    %1692 = vmatpush1.xpose.msra.mxu0 0.0
    %1693 = vmatprep.subr.mxu0 0.0
    %1694 = vmatpush1.xpose.msra.mxu0 0.0
    %1695 = vmatprep.subr.mxu0 0.0
    %1696 = vmatpush1.xpose.msra.mxu0 0.0
    %1697 = vmatprep.subr.mxu0 0.0
    %1698 = vmatpush1.xpose.msra.mxu0 0.0
    %1699 = vmatprep.subr.mxu0 0.0
    %1700 = vmatpush1.xpose.msra.mxu0 0.0
    %1701 = vmatprep.subr.mxu0 0.0
    %1702 = vmatpush1.xpose.msra.mxu0 0.0
    %1703 = vmatprep.mubr.f32.mxu0 0.0
    %1704 = vmatmul.mubr.f32.gmra.mrb[0].mxu0 %v1631
    %v1705 = vpop.f32.mrb[0].mxu0
    %v1706 = vadd.f32 0.0, %v1705
    %v1707 = vpop.f32.mrb[0].mxu0
    %1708 = vmatprep.mubr.f32.mxu0 0.0
    %1709 = vmatmul.mubr.f32.gmra.mrb[0].mxu0 %v1633
    %v1710 = vpop.f32.mrb[0].mxu0
    %v1711 = vadd.f32 0.0, %v1710
    %v1712 = vpop.f32.mrb[0].mxu0
    %1713 = vdwg.mxu0
    %v1714 = vsel %vm406, %v1706, -inf
    %1715 = vmax.xlane.f32.xlu0 %v1714
    %v1716 = vpop.xlane.xlu0 %1715
    %v1717 = vsel %vm406, %v1711, -inf
    %1718 = vmax.xlane.f32.xlu0 %v1717
    %v1719 = vpop.xlane.xlu0 %1718
    %v1720 = vsub.f32 %v1706, %v1716
    %v1721 = vsub.f32 %v1711, %v1719
    %v1722 = vmul.f32 %v1720, 1.442695
    %v1723 = vpow.pop %v1722
    %v1724 = vmul.f32 %v1721, 1.442695
    %v1725 = vpow.pop %v1724
    %v1726 = vsel %vm406, %v1723, 0.0
    %1727 = vadd.xlane.f32.xlu0 %v1726
    %v1728 = vpop.xlane.xlu0 %1727
    %v1729 = vsel %vm406, %v1725, 0.0
    %1730 = vadd.xlane.f32.xlu0 %v1729
    %v1731 = vpop.xlane.xlu0 %1730
    %v1732 = vrcp.pop %v1728
    %v1733 = vmul.f32 %v1723, %v1732
    %v1734 = vrcp.pop %v1731
    %v1735 = vmul.f32 %v1725, %v1734
    %1736 = vrot.lane.b32.xlu0 %v318, 96
    %v1737 = vpop.permute.xlu0 %1736
    %1738 = vrot.lane.b32.xlu0 %v323, 96
    %v1739 = vpop.permute.xlu0 %1738
    %v1743 = vsel %vm406, %v1733, 0
    %v1746 = vsel %vm406, %v1735, 0
    %1748 = vmatprep.subr.mxu0 0.0
    %1749 = vmatpush1.msra.mxu0 %v1737
    %1750 = vmatprep.subr.mxu0 0.0
    %1751 = vmatpush1.msra.mxu0 %v1739
    %1752 = vmatprep.subr.mxu0 0.0
    %1753 = vmatpush1.msra.mxu0 0.0
    %1754 = vmatprep.subr.mxu0 0.0
    %1755 = vmatpush1.msra.mxu0 0.0
    %1756 = vmatprep.subr.mxu0 0.0
    %1757 = vmatpush1.msra.mxu0 0.0
    %1758 = vmatprep.subr.mxu0 0.0
    %1759 = vmatpush1.msra.mxu0 0.0
    %1760 = vmatprep.subr.mxu0 0.0
    %1761 = vmatpush1.msra.mxu0 0.0
    %1762 = vmatprep.subr.mxu0 0.0
    %1763 = vmatpush1.msra.mxu0 0.0
    %1764 = vmatprep.subr.mxu0 0.0
    %1765 = vmatpush1.msra.mxu0 0.0
    %1766 = vmatprep.subr.mxu0 0.0
    %1767 = vmatpush1.msra.mxu0 0.0
    %1768 = vmatprep.subr.mxu0 0.0
    %1769 = vmatpush1.msra.mxu0 0.0
    %1770 = vmatprep.subr.mxu0 0.0
    %1771 = vmatpush1.msra.mxu0 0.0
    %1772 = vmatprep.subr.mxu0 0.0
    %1773 = vmatpush1.msra.mxu0 0.0
    %1774 = vmatprep.subr.mxu0 0.0
    %1775 = vmatpush1.msra.mxu0 0.0
    %1776 = vmatprep.subr.mxu0 0.0
    %1777 = vmatpush1.msra.mxu0 0.0
    %1778 = vmatprep.subr.mxu0 0.0
    %1779 = vmatpush1.msra.mxu0 0.0
    %1780 = vmatprep.subr.mxu0 0.0
    %1781 = vmatpush1.msra.mxu0 0.0
    %1782 = vmatprep.subr.mxu0 0.0
    %1783 = vmatpush1.msra.mxu0 0.0
    %1784 = vmatprep.subr.mxu0 0.0
    %1785 = vmatpush1.msra.mxu0 0.0
    %1786 = vmatprep.subr.mxu0 0.0
    %1787 = vmatpush1.msra.mxu0 0.0
    %1788 = vmatprep.subr.mxu0 0.0
    %1789 = vmatpush1.msra.mxu0 0.0
    %1790 = vmatprep.subr.mxu0 0.0
    %1791 = vmatpush1.msra.mxu0 0.0
    %1792 = vmatprep.subr.mxu0 0.0
    %1793 = vmatpush1.msra.mxu0 0.0
    %1794 = vmatprep.subr.mxu0 0.0
    %1795 = vmatpush1.msra.mxu0 0.0
    %1796 = vmatprep.subr.mxu0 0.0
    %1797 = vmatpush1.msra.mxu0 0.0
    %1798 = vmatprep.subr.mxu0 0.0
    %1799 = vmatpush1.msra.mxu0 0.0
    %1800 = vmatprep.subr.mxu0 0.0
    %1801 = vmatpush1.msra.mxu0 0.0
    %1802 = vmatprep.subr.mxu0 0.0
    %1803 = vmatpush1.msra.mxu0 0.0
    %1804 = vmatprep.subr.mxu0 0.0
    %1805 = vmatpush1.msra.mxu0 0.0
    %1806 = vmatprep.subr.mxu0 0.0
    %1807 = vmatpush1.msra.mxu0 0.0
    %1808 = vmatprep.subr.mxu0 0.0
    %1809 = vmatpush1.msra.mxu0 0.0
    %1810 = vmatprep.subr.mxu0 0.0
    %1811 = vmatpush1.msra.mxu0 0.0
    %1812 = vmatprep.mubr.f32.mxu0 0.0
    %1813 = vmatmul.mubr.f32.gmra.mrb[0].mxu0 %v1743
    %v1814 = vpop.f32.mrb[0].mxu0
    %v1815 = vadd.f32 0.0, %v1814
    %v1816 = vpop.f32.mrb[0].mxu0
    %1817 = vmatprep.mubr.f32.mxu0 0.0
    %1818 = vmatmul.mubr.f32.gmra.mrb[0].mxu0 %v1746
    %v1819 = vpop.f32.mrb[0].mxu0
    %v1820 = vadd.f32 0.0, %v1819
    %v1821 = vpop.f32.mrb[0].mxu0
    %1822 = vdwg.mxu0
    %1823 = vrot.lane.b32.xlu0 %v376, 80
    %v1824 = vpop.permute.xlu0 %1823
    %1825 = vrot.lane.b32.xlu0 %v377, 80
    %v1826 = vpop.permute.xlu0 %1825
    %1827 = vrot.lane.b32.xlu0 %v404, 80
    %v1828 = vpop.permute.xlu0 %1827
    %1829 = vrot.lane.b32.xlu0 %v405, 80
    %v1830 = vpop.permute.xlu0 %1829
    %v1831 = vsel %vm406, %v1824, 0
    %v1833 = vsel %vm406, %v1826, 0
    %v1835 = vsel %vm406, %v1828, 0
    %v1837 = vsel %vm406, %v1830, 0
    %1839 = vmatprep.subr.mxu0 0.0
    %1840 = vmatpush1.xpose.msra.mxu0 %v1835
    %1841 = vmatprep.subr.mxu0 0.0
    %1842 = vmatpush1.xpose.msra.mxu0 %v1837
    %1843 = vmatprep.subr.mxu0 0.0
    %1844 = vmatpush1.xpose.msra.mxu0 0.0
    %1845 = vmatprep.subr.mxu0 0.0
    %1846 = vmatpush1.xpose.msra.mxu0 0.0
    %1847 = vmatprep.subr.mxu0 0.0
    %1848 = vmatpush1.xpose.msra.mxu0 0.0
    %1849 = vmatprep.subr.mxu0 0.0
    %1850 = vmatpush1.xpose.msra.mxu0 0.0
    %1851 = vmatprep.subr.mxu0 0.0
    %1852 = vmatpush1.xpose.msra.mxu0 0.0
    %1853 = vmatprep.subr.mxu0 0.0
    %1854 = vmatpush1.xpose.msra.mxu0 0.0
    %1855 = vmatprep.subr.mxu0 0.0
    %1856 = vmatpush1.xpose.msra.mxu0 0.0
    %1857 = vmatprep.subr.mxu0 0.0
    %1858 = vmatpush1.xpose.msra.mxu0 0.0
    %1859 = vmatprep.subr.mxu0 0.0
    %1860 = vmatpush1.xpose.msra.mxu0 0.0
    %1861 = vmatprep.subr.mxu0 0.0
    %1862 = vmatpush1.xpose.msra.mxu0 0.0
    %1863 = vmatprep.subr.mxu0 0.0
    %1864 = vmatpush1.xpose.msra.mxu0 0.0
    %1865 = vmatprep.subr.mxu0 0.0
    %1866 = vmatpush1.xpose.msra.mxu0 0.0
    %1867 = vmatprep.subr.mxu0 0.0
    %1868 = vmatpush1.xpose.msra.mxu0 0.0
    %1869 = vmatprep.subr.mxu0 0.0
    %1870 = vmatpush1.xpose.msra.mxu0 0.0
    %1871 = vmatprep.subr.mxu0 0.0
    %1872 = vmatpush1.xpose.msra.mxu0 0.0
    %1873 = vmatprep.subr.mxu0 0.0
    %1874 = vmatpush1.xpose.msra.mxu0 0.0
    %1875 = vmatprep.subr.mxu0 0.0
    %1876 = vmatpush1.xpose.msra.mxu0 0.0
    %1877 = vmatprep.subr.mxu0 0.0
    %1878 = vmatpush1.xpose.msra.mxu0 0.0
    %1879 = vmatprep.subr.mxu0 0.0
    %1880 = vmatpush1.xpose.msra.mxu0 0.0
    %1881 = vmatprep.subr.mxu0 0.0
    %1882 = vmatpush1.xpose.msra.mxu0 0.0
    %1883 = vmatprep.subr.mxu0 0.0
    %1884 = vmatpush1.xpose.msra.mxu0 0.0
    %1885 = vmatprep.subr.mxu0 0.0
    %1886 = vmatpush1.xpose.msra.mxu0 0.0
    %1887 = vmatprep.subr.mxu0 0.0
    %1888 = vmatpush1.xpose.msra.mxu0 0.0
    %1889 = vmatprep.subr.mxu0 0.0
    %1890 = vmatpush1.xpose.msra.mxu0 0.0
    %1891 = vmatprep.subr.mxu0 0.0
    %1892 = vmatpush1.xpose.msra.mxu0 0.0
    %1893 = vmatprep.subr.mxu0 0.0
    %1894 = vmatpush1.xpose.msra.mxu0 0.0
    %1895 = vmatprep.subr.mxu0 0.0
    %1896 = vmatpush1.xpose.msra.mxu0 0.0
    %1897 = vmatprep.subr.mxu0 0.0
    %1898 = vmatpush1.xpose.msra.mxu0 0.0
    %1899 = vmatprep.subr.mxu0 0.0
    %1900 = vmatpush1.xpose.msra.mxu0 0.0
    %1901 = vmatprep.subr.mxu0 0.0
    %1902 = vmatpush1.xpose.msra.mxu0 0.0
    %1903 = vmatprep.mubr.f32.mxu0 0.0
    %1904 = vmatmul.mubr.f32.gmra.mrb[0].mxu0 %v1831
    %v1905 = vpop.f32.mrb[0].mxu0
    %v1906 = vadd.f32 0.0, %v1905
    %v1907 = vpop.f32.mrb[0].mxu0
    %1908 = vmatprep.mubr.f32.mxu0 0.0
    %1909 = vmatmul.mubr.f32.gmra.mrb[0].mxu0 %v1833
    %v1910 = vpop.f32.mrb[0].mxu0
    %v1911 = vadd.f32 0.0, %v1910
    %v1912 = vpop.f32.mrb[0].mxu0
    %1913 = vdwg.mxu0
    %v1914 = vsel %vm406, %v1906, -inf
    %1915 = vmax.xlane.f32.xlu0 %v1914
    %v1916 = vpop.xlane.xlu0 %1915
    %v1917 = vsel %vm406, %v1911, -inf
    %1918 = vmax.xlane.f32.xlu0 %v1917
    %v1919 = vpop.xlane.xlu0 %1918
    %v1920 = vsub.f32 %v1906, %v1916
    %v1921 = vsub.f32 %v1911, %v1919
    %v1922 = vmul.f32 %v1920, 1.442695
    %v1923 = vpow.pop %v1922
    %v1924 = vmul.f32 %v1921, 1.442695
    %v1925 = vpow.pop %v1924
    %v1926 = vsel %vm406, %v1923, 0.0
    %1927 = vadd.xlane.f32.xlu0 %v1926
    %v1928 = vpop.xlane.xlu0 %1927
    %v1929 = vsel %vm406, %v1925, 0.0
    %1930 = vadd.xlane.f32.xlu0 %v1929
    %v1931 = vpop.xlane.xlu0 %1930
    %v1932 = vrcp.pop %v1928
    %v1933 = vmul.f32 %v1923, %v1932
    %v1934 = vrcp.pop %v1931
    %v1935 = vmul.f32 %v1925, %v1934
    %1936 = vrot.lane.b32.xlu0 %v318, 80
    %v1937 = vpop.permute.xlu0 %1936
    %1938 = vrot.lane.b32.xlu0 %v323, 80
    %v1939 = vpop.permute.xlu0 %1938
    %v1943 = vsel %vm406, %v1933, 0
    %v1946 = vsel %vm406, %v1935, 0
    %1948 = vmatprep.subr.mxu0 0.0
    %1949 = vmatpush1.msra.mxu0 %v1937
    %1950 = vmatprep.subr.mxu0 0.0
    %1951 = vmatpush1.msra.mxu0 %v1939
    %1952 = vmatprep.subr.mxu0 0.0
    %1953 = vmatpush1.msra.mxu0 0.0
    %1954 = vmatprep.subr.mxu0 0.0
    %1955 = vmatpush1.msra.mxu0 0.0
    %1956 = vmatprep.subr.mxu0 0.0
    %1957 = vmatpush1.msra.mxu0 0.0
    %1958 = vmatprep.subr.mxu0 0.0
    %1959 = vmatpush1.msra.mxu0 0.0
    %1960 = vmatprep.subr.mxu0 0.0
    %1961 = vmatpush1.msra.mxu0 0.0
    %1962 = vmatprep.subr.mxu0 0.0
    %1963 = vmatpush1.msra.mxu0 0.0
    %1964 = vmatprep.subr.mxu0 0.0
    %1965 = vmatpush1.msra.mxu0 0.0
    %1966 = vmatprep.subr.mxu0 0.0
    %1967 = vmatpush1.msra.mxu0 0.0
    %1968 = vmatprep.subr.mxu0 0.0
    %1969 = vmatpush1.msra.mxu0 0.0
    %1970 = vmatprep.subr.mxu0 0.0
    %1971 = vmatpush1.msra.mxu0 0.0
    %1972 = vmatprep.subr.mxu0 0.0
    %1973 = vmatpush1.msra.mxu0 0.0
    %1974 = vmatprep.subr.mxu0 0.0
    %1975 = vmatpush1.msra.mxu0 0.0
    %1976 = vmatprep.subr.mxu0 0.0
    %1977 = vmatpush1.msra.mxu0 0.0
    %1978 = vmatprep.subr.mxu0 0.0
    %1979 = vmatpush1.msra.mxu0 0.0
    %1980 = vmatprep.subr.mxu0 0.0
    %1981 = vmatpush1.msra.mxu0 0.0
    %1982 = vmatprep.subr.mxu0 0.0
    %1983 = vmatpush1.msra.mxu0 0.0
    %1984 = vmatprep.subr.mxu0 0.0
    %1985 = vmatpush1.msra.mxu0 0.0
    %1986 = vmatprep.subr.mxu0 0.0
    %1987 = vmatpush1.msra.mxu0 0.0
    %1988 = vmatprep.subr.mxu0 0.0
    %1989 = vmatpush1.msra.mxu0 0.0
    %1990 = vmatprep.subr.mxu0 0.0
    %1991 = vmatpush1.msra.mxu0 0.0
    %1992 = vmatprep.subr.mxu0 0.0
    %1993 = vmatpush1.msra.mxu0 0.0
    %1994 = vmatprep.subr.mxu0 0.0
    %1995 = vmatpush1.msra.mxu0 0.0
    %1996 = vmatprep.subr.mxu0 0.0
    %1997 = vmatpush1.msra.mxu0 0.0
    %1998 = vmatprep.subr.mxu0 0.0
    %1999 = vmatpush1.msra.mxu0 0.0
    %2000 = vmatprep.subr.mxu0 0.0
    %2001 = vmatpush1.msra.mxu0 0.0
    %2002 = vmatprep.subr.mxu0 0.0
    %2003 = vmatpush1.msra.mxu0 0.0
    %2004 = vmatprep.subr.mxu0 0.0
    %2005 = vmatpush1.msra.mxu0 0.0
    %2006 = vmatprep.subr.mxu0 0.0
    %2007 = vmatpush1.msra.mxu0 0.0
    %2008 = vmatprep.subr.mxu0 0.0
    %2009 = vmatpush1.msra.mxu0 0.0
    %2010 = vmatprep.subr.mxu0 0.0
    %2011 = vmatpush1.msra.mxu0 0.0
    %2012 = vmatprep.mubr.f32.mxu0 0.0
    %2013 = vmatmul.mubr.f32.gmra.mrb[0].mxu0 %v1943
    %v2014 = vpop.f32.mrb[0].mxu0
    %v2015 = vadd.f32 0.0, %v2014
    %v2016 = vpop.f32.mrb[0].mxu0
    %2017 = vmatprep.mubr.f32.mxu0 0.0
    %2018 = vmatmul.mubr.f32.gmra.mrb[0].mxu0 %v1946
    %v2019 = vpop.f32.mrb[0].mxu0
    %v2020 = vadd.f32 0.0, %v2019
    %v2021 = vpop.f32.mrb[0].mxu0
    %2022 = vdwg.mxu0
    %2025 = vrot.lane.b32.xlu0 %v1615, 16
    %v2026 = vpop.permute.xlu0 %2025
    %2027 = vrot.lane.b32.xlu0 %v1620, 16
    %v2028 = vpop.permute.xlu0 %2027
    %2033 = vrot.lane.b32.xlu0 %v1815, 32
    %v2034 = vpop.permute.xlu0 %2033
    %2035 = vrot.lane.b32.xlu0 %v1820, 32
    %v2036 = vpop.permute.xlu0 %2035
    %2041 = vrot.lane.b32.xlu0 %v2015, 48
    %v2042 = vpop.permute.xlu0 %2041
    %2043 = vrot.lane.b32.xlu0 %v2020, 48
    %v2044 = vpop.permute.xlu0 %2043
    %v2047 = vsel %vm406, %v1413, %v2026
    %v2048 = vsel %vm406, %v1418, %v2028
    %v2049 = vsel %vm1225, %v2047, %v2034
    %v2050 = vsel %vm1225, %v2048, %v2036
    %v2051 = vsel %vm1228, %v2049, %v2042
    %v2052 = vsel %vm1228, %v2050, %v2044
    %v2053 = vld [vmem:[#allocation6] sm:$0xff]
    %v2054 = vld [vmem:[#allocation6 + $0x8] sm:$0xff]
    %v2055 = vld [vmem:[#allocation6 + $0x10] sm:$0xff]
    %v2056 = vld [vmem:[#allocation6 + $0x18] sm:$0xff]
    %v2057 = vld [vmem:[#allocation6 + $0x20] sm:$0xff]
    %v2058 = vld [vmem:[#allocation6 + $0x28] sm:$0xff]
    %v2059 = vld [vmem:[#allocation6 + $0x30] sm:$0xff]
    %v2060 = vld [vmem:[#allocation6 + $0x38] sm:$0xff]
    %v2061 = vld [vmem:[%s4] sm:$0x1]
    %v2063 = vlaneseq
    %v2064 = vshrl.u32 %v2063, 7
    %v2065 = vsub.s32 0, %v2064
    %v2066 = vrot.slane %v2061, %v2065
    %v2069 = vsel %vm139, %v1229, 0
    %v2072 = vsel %vm139, %v1230, 0
    %v2075 = vsel %vm139, %v2051, 0
    %v2078 = vsel %vm139, %v2052, 0
    %2080 = vmatprep.subr.mxu0 0.0
    %2081 = vmatpush1.msra.mxu0 %v2053
    %2082 = vmatprep.subr.mxu0 0.0
    %2083 = vmatpush1.msra.mxu0 %v2054
    %2084 = vmatprep.subr.mxu0 0.0
    %2085 = vmatpush1.msra.mxu0 %v2055
    %2086 = vmatprep.subr.mxu0 0.0
    %2087 = vmatpush1.msra.mxu0 %v2056
    %2088 = vmatprep.subr.mxu0 0.0
    %2089 = vmatpush1.msra.mxu0 %v2057
    %2090 = vmatprep.subr.mxu0 0.0
    %2091 = vmatpush1.msra.mxu0 %v2058
    %2092 = vmatprep.subr.mxu0 0.0
    %2093 = vmatpush1.msra.mxu0 %v2059
    %2094 = vmatprep.subr.mxu0 0.0
    %2095 = vmatpush1.msra.mxu0 %v2060
    %2096 = vmatprep.subr.mxu0 0.0
    %2097 = vmatpush1.msra.mxu0 0.0
    %2098 = vmatprep.subr.mxu0 0.0
    %2099 = vmatpush1.msra.mxu0 0.0
    %2100 = vmatprep.subr.mxu0 0.0
    %2101 = vmatpush1.msra.mxu0 0.0
    %2102 = vmatprep.subr.mxu0 0.0
    %2103 = vmatpush1.msra.mxu0 0.0
    %2104 = vmatprep.subr.mxu0 0.0
    %2105 = vmatpush1.msra.mxu0 0.0
    %2106 = vmatprep.subr.mxu0 0.0
    %2107 = vmatpush1.msra.mxu0 0.0
    %2108 = vmatprep.subr.mxu0 0.0
    %2109 = vmatpush1.msra.mxu0 0.0
    %2110 = vmatprep.subr.mxu0 0.0
    %2111 = vmatpush1.msra.mxu0 0.0
    %2112 = vmatprep.subr.mxu0 0.0
    %2113 = vmatpush1.msra.mxu0 0.0
    %2114 = vmatprep.subr.mxu0 0.0
    %2115 = vmatpush1.msra.mxu0 0.0
    %2116 = vmatprep.subr.mxu0 0.0
    %2117 = vmatpush1.msra.mxu0 0.0
    %2118 = vmatprep.subr.mxu0 0.0
    %2119 = vmatpush1.msra.mxu0 0.0
    %2120 = vmatprep.subr.mxu0 0.0
    %2121 = vmatpush1.msra.mxu0 0.0
    %2122 = vmatprep.subr.mxu0 0.0
    %2123 = vmatpush1.msra.mxu0 0.0
    %2124 = vmatprep.subr.mxu0 0.0
    %2125 = vmatpush1.msra.mxu0 0.0
    %2126 = vmatprep.subr.mxu0 0.0
    %2127 = vmatpush1.msra.mxu0 0.0
    %2128 = vmatprep.subr.mxu0 0.0
    %2129 = vmatpush1.msra.mxu0 0.0
    %2130 = vmatprep.subr.mxu0 0.0
    %2131 = vmatpush1.msra.mxu0 0.0
    %2132 = vmatprep.subr.mxu0 0.0
    %2133 = vmatpush1.msra.mxu0 0.0
    %2134 = vmatprep.subr.mxu0 0.0
    %2135 = vmatpush1.msra.mxu0 0.0
    %2136 = vmatprep.subr.mxu0 0.0
    %2137 = vmatpush1.msra.mxu0 0.0
    %2138 = vmatprep.subr.mxu0 0.0
    %2139 = vmatpush1.msra.mxu0 0.0
    %2140 = vmatprep.subr.mxu0 0.0
    %2141 = vmatpush1.msra.mxu0 0.0
    %2142 = vmatprep.subr.mxu0 0.0
    %2143 = vmatpush1.msra.mxu0 0.0
    %2144 = vmatprep.mubr.f32.mxu0 0.0
    %2145 = vmatmul.mubr.f32.gmra.mrb[0].mxu0 %v2069
    %v2146 = vpop.f32.mrb[0].mxu0
    %v2147 = vadd.f32 %v2066, %v2146
    %v2148 = vpop.f32.mrb[0].mxu0
    %2149 = vmatprep.mubr.f32.mxu0 0.0
    %2150 = vmatmul.mubr.f32.gmra.mrb[0].mxu0 %v2072
    %v2151 = vpop.f32.mrb[0].mxu0
    %v2152 = vadd.f32 %v2066, %v2151
    %v2153 = vpop.f32.mrb[0].mxu0
    %2154 = vmatprep.mubr.f32.mxu0 0.0
    %2155 = vmatmul.mubr.f32.gmra.mrb[0].mxu0 %v2075
    %v2156 = vpop.f32.mrb[0].mxu0
    %v2157 = vadd.f32 %v2066, %v2156
    %v2158 = vpop.f32.mrb[0].mxu0
    %2159 = vmatprep.mubr.f32.mxu0 0.0
    %2160 = vmatmul.mubr.f32.gmra.mrb[0].mxu0 %v2078
    %v2161 = vpop.f32.mrb[0].mxu0
    %v2162 = vadd.f32 %v2066, %v2161
    %v2163 = vpop.f32.mrb[0].mxu0
    %2164 = vdwg.mxu0
    %2167 = vrot.lane.b32.xlu0 %v2157, 64
    %v2168 = vpop.permute.xlu0 %2167
    %2169 = vrot.lane.b32.xlu0 %v2162, 64
    %v2170 = vpop.permute.xlu0 %2169
    %v2173 = vsel %vm139, %v2147, %v2168
    %v2174 = vsel %vm139, %v2152, %v2170
    %2175 = vst [vmem:[%s7] sm:$0xff] %v2173
    %2176 = vst [vmem:[%s7 + $0x8] sm:$0xff] %v2174
    // Predicated region
    $region50: #{quadratic_self_attention.1} parent=1 // pred_check
      _
    $region51: #{quadratic_self_attention.1} parent=1 // pred_check_branch
      %2178 = sbr.rel (0) target = $region53
    $region52: #{quadratic_self_attention.1} parent=1 // pred_region
      _
    $region53: #{quadratic_self_attention.1} parent=1 // pred_fallthru
      _
    // Predicated region
    $region54: #{quadratic_self_attention.1} parent=1 // pred_check
      _
    $region55: #{quadratic_self_attention.1} parent=1 // pred_check_branch
      %2180 = sbr.rel (0) target = $region57
    $region56: #{quadratic_self_attention.1} parent=1 // pred_region
      _
    $region57: #{quadratic_self_attention.1} parent=1 // pred_fallthru
      _
    %2181 = vsyncpa [#allocation3], 1
    %2182 = vsyncpa [#allocation5], 1
    %2183 = vsyncpa [#allocation8], 1

</llo_original>
